<compile_context>
chip_gen: v5e
topology: v5e:2x2
jax: 0.10.0
libtpu: 0.0.40
codegen_flags: <defaults>
</compile_context>

<pallas_src>
import functools

import jax
import jax.numpy as jnp
from jax.experimental import pallas as pl
from jax.experimental.pallas import tpu as pltpu  # noqa: F401  (kept for scaling hooks)

_SUBLANE = 8  # f32 sublane tile


# ------------------------------ fused kernel ---------------------------------

def _fused_lstm_fc_kernel(*refs, num_layers, hidden_dim, seq_len, batch_pad):
    """refs = [x_flat, (wx_l, wh_l, b_l) * L, w_fc, b_fc, out].

    x_flat : (T*B_pad, D)   time-major, flattened, batch zero-padded to 8
    wx_l   : (D_l, 4H)      pre-transposed input weights
    wh_l   : (H, 4H)        pre-transposed recurrent weights
    b_l    : (1, 4H)        combined bias (b_ih + b_hh)
    w_fc   : (H, O)         pre-transposed FC weight
    b_fc   : (1, O)
    out    : (B_pad, O)
    """
    H, T, B, L = hidden_dim, seq_len, batch_pad, num_layers

    x_ref = refs[0]
    layer_refs = []
    idx = 1
    for _ in range(L):
        layer_refs.append(refs[idx:idx + 3])
        idx += 3
    wfc_ref, bfc_ref, out_ref = refs[idx], refs[idx + 1], refs[idx + 2]

    # All weights resident (tiny at these sizes).
    wx = [r[...] for (r, _, _) in layer_refs]
    wh = [r[...] for (_, r, _) in layer_refs]
    bb = [r[...] for (_, _, r) in layer_refs]

    # Layer 0 input projection hoisted over all timesteps: one big matmul
    # (depends only on input data, so it does not lengthen the dep chain).
    gx0 = jnp.dot(x_ref[...], wx[0], preferred_element_type=jnp.float32) + bb[0]

    h = [jnp.zeros((B, H), jnp.float32) for _ in range(L)]
    c = [jnp.zeros((B, H), jnp.float32) for _ in range(L)]

    def cell(gates, c_prev):
        # Full-width transcendentals (one EUP pass each over the whole
        # (B_pad, 4H) vreg), then lane slices.  For H >= 128 each gate slice
        # is a whole (8,128) tile and the slices become free.
        sig = jax.nn.sigmoid(gates)
        th = jnp.tanh(gates)
        i_g = sig[:, 0 * H:1 * H]
        f_g = sig[:, 1 * H:2 * H]
        g_g = th[:, 2 * H:3 * H]
        o_g = sig[:, 3 * H:4 * H]
        c_new = f_g * c_prev + i_g * g_g
        h_new = o_g * jnp.tanh(c_new)
        return h_new, c_new

    # Wavefront over layers: wavefront step s runs layer l at timestep t=s-l,
    # so steps of adjacent layers are data-independent and their MXU/EUP
    # latencies overlap (critical path ~ T+L-1 instead of T*L).  Decreasing-l
    # order inside a wavefront so layer l reads layer l-1's h from the
    # previous wavefront before layer l-1 overwrites it.
    for s in range(T + L - 1):
        for l in range(L - 1, -1, -1):
            t = s - l
            if 0 <= t < T:
                if l == 0:
                    gates = gx0[t * B:(t + 1) * B, :]          # aligned (8,128) slice
                else:
                    gates = (jnp.dot(h[l - 1], wx[l],
                                     preferred_element_type=jnp.float32)
                             + bb[l])
                gates = gates + jnp.dot(h[l], wh[l],
                                        preferred_element_type=jnp.float32)
                h[l], c[l] = cell(gates, c[l])

    # Final FC on the last timestep hidden state of the last layer.
    # (B_pad, O) with O=4 is a lane-narrow store; fine at this size — pad O to
    # a multiple of 128 and slice outside once O grows.
    out_ref[...] = (jnp.dot(h[L - 1], wfc_ref[...],
                            preferred_element_type=jnp.float32)
                    + bfc_ref[...]).astype(out_ref.dtype)


# --------------------------- one-time weight prep -----------------------------

def prepare_params(params, *, num_layers, hidden_dim):
    """Hoisted out of the per-call forward: transpose weights to (K, N) MXU
    layout and reshape biases once."""
    H = hidden_dim
    prepped = {}
    for l in range(num_layers):
        w_ih, w_hh, b = params[f"lstm_{l}"]
        prepped[f"lstm_{l}"] = (
            jnp.asarray(w_ih).T,                   # (D_l, 4H)
            jnp.asarray(w_hh).T,                   # (H, 4H)
            jnp.asarray(b).reshape(1, 4 * H),      # combined b_ih + b_hh
        )
    w_fc, b_fc = params["fc"]
    prepped["fc"] = (jnp.asarray(w_fc).T, jnp.asarray(b_fc).reshape(1, -1))
    return prepped


# ------------------------------ wrapper ---------------------------------------

@functools.partial(jax.jit, static_argnames=("num_layers", "hidden_dim"))
def vanilla_lstm_forward(x, prepped, *, num_layers, hidden_dim):
    """x: (B, T, D) batch-first (PyTorch convention). Returns (B, O)."""
    B, T, D = x.shape
    H = hidden_dim
    w_fc_t, b_fc = prepped["fc"]
    O = w_fc_t.shape[1]

    # Pad batch to the f32 sublane tile so every per-timestep tensor/slice in
    # the kernel is whole-tile aligned.  Padded rows (zero input, zero h/c)
    # never touch real rows and are sliced off below.
    B_pad = max(_SUBLANE, ((B + _SUBLANE - 1) // _SUBLANE) * _SUBLANE)

    x_tm = jnp.transpose(x, (1, 0, 2))                       # (T, B, D)
    x_tm = jnp.pad(x_tm, ((0, 0), (0, B_pad - B), (0, 0)))   # (T, B_pad, D)
    x_flat = x_tm.reshape(T * B_pad, D)

    inputs = [x_flat]
    in_specs = [pl.BlockSpec((T * B_pad, D), lambda: (0, 0))]
    for l in range(num_layers):
        wx, wh, b = prepped[f"lstm_{l}"]
        d_l = wx.shape[0]
        inputs += [wx, wh, b]
        in_specs += [
            pl.BlockSpec((d_l, 4 * H), lambda: (0, 0)),
            pl.BlockSpec((H, 4 * H), lambda: (0, 0)),
            pl.BlockSpec((1, 4 * H), lambda: (0, 0)),
        ]
    inputs += [w_fc_t, b_fc]
    in_specs += [
        pl.BlockSpec((H, O), lambda: (0, 0)),
        pl.BlockSpec((1, O), lambda: (0, 0)),
    ]

    kernel = functools.partial(_fused_lstm_fc_kernel, num_layers=num_layers,
                               hidden_dim=H, seq_len=T, batch_pad=B_pad)

    out_pad = pl.pallas_call(
        kernel,
        out_shape=jax.ShapeDtypeStruct((B_pad, O), jnp.float32),
        in_specs=in_specs,
        out_specs=pl.BlockSpec((B_pad, O), lambda: (0, 0)),
    )(*inputs)
    return out_pad[:B]


# ------------------------- pure-JAX reference (check) ------------------------

def _reference_forward(x, params, *, num_layers, hidden_dim):
    H = hidden_dim
    h_seq = jnp.transpose(x, (1, 0, 2))              # (T, B, D)
    for l in range(num_layers):
        w_ih, w_hh, b = params[f"lstm_{l}"]

        def step(carry, x_t):
            h, c = carry
            g = x_t @ w_ih.T + h @ w_hh.T + b
            i = jax.nn.sigmoid(g[:, 0 * H:1 * H])
            f = jax.nn.sigmoid(g[:, 1 * H:2 * H])
            gg = jnp.tanh(g[:, 2 * H:3 * H])
            o = jax.nn.sigmoid(g[:, 3 * H:4 * H])
            c = f * c + i * gg
            h = o * jnp.tanh(c)
            return (h, c), h

        B = h_seq.shape[1]
        init = (jnp.zeros((B, H), jnp.float32), jnp.zeros((B, H), jnp.float32))
        _, h_seq = jax.lax.scan(step, init, h_seq)
    w_fc, b_fc = params["fc"]
    return h_seq[-1] @ w_fc.T + b_fc


# ----------------------------------- main -------------------------------------

if __name__ == "__main__":
    # config (small, consistent with the module)
    num_layers = 2
    input_dim = 8
    hidden_dim = 32
    output_len = 4
    batch = 2
    seq = 8

    key = jax.random.PRNGKey(0)
    keys = jax.random.split(key, 2 * num_layers * 2 + 3)
    scale = 1.0 / jnp.sqrt(hidden_dim)

    params = {}
    k_idx = 0
    for l in range(num_layers):
        in_d = input_dim if l == 0 else hidden_dim
        w_ih = jax.random.uniform(keys[k_idx], (4 * hidden_dim, in_d),
                                  jnp.float32, -scale, scale); k_idx += 1
        w_hh = jax.random.uniform(keys[k_idx], (4 * hidden_dim, hidden_dim),
                                  jnp.float32, -scale, scale); k_idx += 1
        b_ih = jax.random.uniform(keys[k_idx], (4 * hidden_dim,),
                                  jnp.float32, -scale, scale); k_idx += 1
        b_hh = jax.random.uniform(keys[k_idx], (4 * hidden_dim,),
                                  jnp.float32, -scale, scale); k_idx += 1
        params[f"lstm_{l}"] = (w_ih, w_hh, b_ih + b_hh)
    w_fc = jax.random.uniform(keys[k_idx], (output_len, hidden_dim),
                              jnp.float32, -scale, scale); k_idx += 1
    b_fc = jax.random.uniform(keys[k_idx], (output_len,),
                              jnp.float32, -scale, scale); k_idx += 1
    params["fc"] = (w_fc, b_fc)

    x = jax.random.normal(keys[k_idx], (batch, seq, input_dim), jnp.float32)

    # One-time parameter preparation (hoisted transposes / reshapes).
    prepped = prepare_params(params, num_layers=num_layers,
                             hidden_dim=hidden_dim)

    out = vanilla_lstm_forward(x, prepped, num_layers=num_layers,
                               hidden_dim=hidden_dim)
    out = jax.block_until_ready(out)

    ref = _reference_forward(x, params, num_layers=num_layers,
                             hidden_dim=hidden_dim)
    assert out.shape == (batch, output_len)
    assert jnp.allclose(out, ref, atol=1e-4, rtol=1e-4), "mismatch vs reference"

    print("KERNEL_OK")
</pallas_src>

<mosaic_0001>
module attributes {stable_mosaic.version = 11 : i64} {
  func.func @_fused_lstm_fc_kernel(%arg0: memref<64x8xf32, #tpu.memory_space<vmem>>, %arg1: memref<8x128xf32, #tpu.memory_space<vmem>>, %arg2: memref<32x128xf32, #tpu.memory_space<vmem>>, %arg3: memref<1x128xf32, #tpu.memory_space<vmem>>, %arg4: memref<32x128xf32, #tpu.memory_space<vmem>>, %arg5: memref<32x128xf32, #tpu.memory_space<vmem>>, %arg6: memref<1x128xf32, #tpu.memory_space<vmem>>, %arg7: memref<32x4xf32, #tpu.memory_space<vmem>>, %arg8: memref<1x4xf32, #tpu.memory_space<vmem>>, %arg9: memref<8x4xf32, #tpu.memory_space<vmem>>) attributes {dimension_semantics = [], scalar_prefetch = 0 : i64, scratch_operands = 0 : i64, tpu.core_type = #tpu.core_type<tc>} {
    %c0 = arith.constant 0 : index
    %c0_0 = arith.constant 0 : index
    %0 = vector.load %arg1[%c0, %c0_0] : memref<8x128xf32, #tpu.memory_space<vmem>>, vector<8x128xf32>
    %c0_1 = arith.constant 0 : index
    %c0_2 = arith.constant 0 : index
    %1 = vector.load %arg4[%c0_1, %c0_2] : memref<32x128xf32, #tpu.memory_space<vmem>>, vector<32x128xf32>
    %c0_3 = arith.constant 0 : index
    %c0_4 = arith.constant 0 : index
    %2 = vector.load %arg2[%c0_3, %c0_4] : memref<32x128xf32, #tpu.memory_space<vmem>>, vector<32x128xf32>
    %c0_5 = arith.constant 0 : index
    %c0_6 = arith.constant 0 : index
    %3 = vector.load %arg5[%c0_5, %c0_6] : memref<32x128xf32, #tpu.memory_space<vmem>>, vector<32x128xf32>
    %c0_7 = arith.constant 0 : index
    %c0_8 = arith.constant 0 : index
    %4 = vector.load %arg3[%c0_7, %c0_8] : memref<1x128xf32, #tpu.memory_space<vmem>>, vector<1x128xf32>
    %c0_9 = arith.constant 0 : index
    %c0_10 = arith.constant 0 : index
    %5 = vector.load %arg6[%c0_9, %c0_10] : memref<1x128xf32, #tpu.memory_space<vmem>>, vector<1x128xf32>
    %c0_11 = arith.constant 0 : index
    %c0_12 = arith.constant 0 : index
    %6 = vector.load %arg0[%c0_11, %c0_12] : memref<64x8xf32, #tpu.memory_space<vmem>>, vector<64x8xf32>
    %cst = arith.constant dense<0.000000e+00> : vector<64x128xf32>
    %7 = tpu.matmul %6, %0, %cst {dimension_numbers = #tpu.dot_dimension_numbers<[1], [0], [0], [1], [0, 0, 1, 1], [], []>} : vector<64x8xf32>, vector<8x128xf32>, vector<64x128xf32> -> vector<64x128xf32>
    %8 = vector.broadcast %4 : vector<1x128xf32> to vector<64x128xf32>
    %9 = arith.addf %7, %8 : vector<64x128xf32>
    %cst_13 = arith.constant 0.000000e+00 : f32
    %10 = vector.broadcast %cst_13 : f32 to vector<8x32xf32>
    %cst_14 = arith.constant 0.000000e+00 : f32
    %11 = vector.broadcast %cst_14 : f32 to vector<8x32xf32>
    %cst_15 = arith.constant 0.000000e+00 : f32
    %12 = vector.broadcast %cst_15 : f32 to vector<8x32xf32>
    %cst_16 = arith.constant 0.000000e+00 : f32
    %13 = vector.broadcast %cst_16 : f32 to vector<8x32xf32>
    %14 = vector.extract_strided_slice %9 {offsets = [0, 0], sizes = [8, 128], strides = [1, 1]} : vector<64x128xf32> to vector<8x128xf32>
    %cst_17 = arith.constant dense<0.000000e+00> : vector<8x128xf32>
    %15 = tpu.matmul %10, %2, %cst_17 {dimension_numbers = #tpu.dot_dimension_numbers<[1], [0], [0], [1], [0, 0, 1, 1], [], []>} : vector<8x32xf32>, vector<32x128xf32>, vector<8x128xf32> -> vector<8x128xf32>
    %16 = arith.addf %14, %15 : vector<8x128xf32>
    %17 = arith.negf %16 : vector<8x128xf32>
    %18 = math.exp %17 : vector<8x128xf32>
    %cst_18 = arith.constant 1.000000e+00 : f32
    %19 = vector.broadcast %cst_18 : f32 to vector<8x128xf32>
    %20 = arith.addf %19, %18 : vector<8x128xf32>
    %21 = arith.divf %19, %20 : vector<8x128xf32>
    %22 = math.tanh %16 : vector<8x128xf32>
    %23 = vector.extract_strided_slice %21 {offsets = [0, 0], sizes = [8, 32], strides = [1, 1]} : vector<8x128xf32> to vector<8x32xf32>
    %24 = vector.extract_strided_slice %21 {offsets = [0, 32], sizes = [8, 32], strides = [1, 1]} : vector<8x128xf32> to vector<8x32xf32>
    %25 = vector.extract_strided_slice %22 {offsets = [0, 64], sizes = [8, 32], strides = [1, 1]} : vector<8x128xf32> to vector<8x32xf32>
    %26 = vector.extract_strided_slice %21 {offsets = [0, 96], sizes = [8, 32], strides = [1, 1]} : vector<8x128xf32> to vector<8x32xf32>
    %27 = arith.mulf %24, %12 : vector<8x32xf32>
    %28 = arith.mulf %23, %25 : vector<8x32xf32>
    %29 = arith.addf %27, %28 : vector<8x32xf32>
    %30 = math.tanh %29 : vector<8x32xf32>
    %31 = arith.mulf %26, %30 : vector<8x32xf32>
    %cst_19 = arith.constant dense<0.000000e+00> : vector<8x128xf32>
    %32 = tpu.matmul %31, %1, %cst_19 {dimension_numbers = #tpu.dot_dimension_numbers<[1], [0], [0], [1], [0, 0, 1, 1], [], []>} : vector<8x32xf32>, vector<32x128xf32>, vector<8x128xf32> -> vector<8x128xf32>
    %33 = vector.broadcast %5 : vector<1x128xf32> to vector<8x128xf32>
    %34 = arith.addf %32, %33 : vector<8x128xf32>
    %cst_20 = arith.constant dense<0.000000e+00> : vector<8x128xf32>
    %35 = tpu.matmul %11, %3, %cst_20 {dimension_numbers = #tpu.dot_dimension_numbers<[1], [0], [0], [1], [0, 0, 1, 1], [], []>} : vector<8x32xf32>, vector<32x128xf32>, vector<8x128xf32> -> vector<8x128xf32>
    %36 = arith.addf %34, %35 : vector<8x128xf32>
    %37 = arith.negf %36 : vector<8x128xf32>
    %38 = math.exp %37 : vector<8x128xf32>
    %cst_21 = arith.constant 1.000000e+00 : f32
    %39 = vector.broadcast %cst_21 : f32 to vector<8x128xf32>
    %40 = arith.addf %39, %38 : vector<8x128xf32>
    %41 = arith.divf %39, %40 : vector<8x128xf32>
    %42 = math.tanh %36 : vector<8x128xf32>
    %43 = vector.extract_strided_slice %41 {offsets = [0, 0], sizes = [8, 32], strides = [1, 1]} : vector<8x128xf32> to vector<8x32xf32>
    %44 = vector.extract_strided_slice %41 {offsets = [0, 32], sizes = [8, 32], strides = [1, 1]} : vector<8x128xf32> to vector<8x32xf32>
    %45 = vector.extract_strided_slice %42 {offsets = [0, 64], sizes = [8, 32], strides = [1, 1]} : vector<8x128xf32> to vector<8x32xf32>
    %46 = vector.extract_strided_slice %41 {offsets = [0, 96], sizes = [8, 32], strides = [1, 1]} : vector<8x128xf32> to vector<8x32xf32>
    %47 = arith.mulf %44, %13 : vector<8x32xf32>
    %48 = arith.mulf %43, %45 : vector<8x32xf32>
    %49 = arith.addf %47, %48 : vector<8x32xf32>
    %50 = math.tanh %49 : vector<8x32xf32>
    %51 = arith.mulf %46, %50 : vector<8x32xf32>
    %52 = vector.extract_strided_slice %9 {offsets = [8, 0], sizes = [8, 128], strides = [1, 1]} : vector<64x128xf32> to vector<8x128xf32>
    %cst_22 = arith.constant dense<0.000000e+00> : vector<8x128xf32>
    %53 = tpu.matmul %31, %2, %cst_22 {dimension_numbers = #tpu.dot_dimension_numbers<[1], [0], [0], [1], [0, 0, 1, 1], [], []>} : vector<8x32xf32>, vector<32x128xf32>, vector<8x128xf32> -> vector<8x128xf32>
    %54 = arith.addf %52, %53 : vector<8x128xf32>
    %55 = arith.negf %54 : vector<8x128xf32>
    %56 = math.exp %55 : vector<8x128xf32>
    %cst_23 = arith.constant 1.000000e+00 : f32
    %57 = vector.broadcast %cst_23 : f32 to vector<8x128xf32>
    %58 = arith.addf %57, %56 : vector<8x128xf32>
    %59 = arith.divf %57, %58 : vector<8x128xf32>
    %60 = math.tanh %54 : vector<8x128xf32>
    %61 = vector.extract_strided_slice %59 {offsets = [0, 0], sizes = [8, 32], strides = [1, 1]} : vector<8x128xf32> to vector<8x32xf32>
    %62 = vector.extract_strided_slice %59 {offsets = [0, 32], sizes = [8, 32], strides = [1, 1]} : vector<8x128xf32> to vector<8x32xf32>
    %63 = vector.extract_strided_slice %60 {offsets = [0, 64], sizes = [8, 32], strides = [1, 1]} : vector<8x128xf32> to vector<8x32xf32>
    %64 = vector.extract_strided_slice %59 {offsets = [0, 96], sizes = [8, 32], strides = [1, 1]} : vector<8x128xf32> to vector<8x32xf32>
    %65 = arith.mulf %62, %29 : vector<8x32xf32>
    %66 = arith.mulf %61, %63 : vector<8x32xf32>
    %67 = arith.addf %65, %66 : vector<8x32xf32>
    %68 = math.tanh %67 : vector<8x32xf32>
    %69 = arith.mulf %64, %68 : vector<8x32xf32>
    %cst_24 = arith.constant dense<0.000000e+00> : vector<8x128xf32>
    %70 = tpu.matmul %69, %1, %cst_24 {dimension_numbers = #tpu.dot_dimension_numbers<[1], [0], [0], [1], [0, 0, 1, 1], [], []>} : vector<8x32xf32>, vector<32x128xf32>, vector<8x128xf32> -> vector<8x128xf32>
    %71 = vector.broadcast %5 : vector<1x128xf32> to vector<8x128xf32>
    %72 = arith.addf %70, %71 : vector<8x128xf32>
    %cst_25 = arith.constant dense<0.000000e+00> : vector<8x128xf32>
    %73 = tpu.matmul %51, %3, %cst_25 {dimension_numbers = #tpu.dot_dimension_numbers<[1], [0], [0], [1], [0, 0, 1, 1], [], []>} : vector<8x32xf32>, vector<32x128xf32>, vector<8x128xf32> -> vector<8x128xf32>
    %74 = arith.addf %72, %73 : vector<8x128xf32>
    %75 = arith.negf %74 : vector<8x128xf32>
    %76 = math.exp %75 : vector<8x128xf32>
    %cst_26 = arith.constant 1.000000e+00 : f32
    %77 = vector.broadcast %cst_26 : f32 to vector<8x128xf32>
    %78 = arith.addf %77, %76 : vector<8x128xf32>
    %79 = arith.divf %77, %78 : vector<8x128xf32>
    %80 = math.tanh %74 : vector<8x128xf32>
    %81 = vector.extract_strided_slice %79 {offsets = [0, 0], sizes = [8, 32], strides = [1, 1]} : vector<8x128xf32> to vector<8x32xf32>
    %82 = vector.extract_strided_slice %79 {offsets = [0, 32], sizes = [8, 32], strides = [1, 1]} : vector<8x128xf32> to vector<8x32xf32>
    %83 = vector.extract_strided_slice %80 {offsets = [0, 64], sizes = [8, 32], strides = [1, 1]} : vector<8x128xf32> to vector<8x32xf32>
    %84 = vector.extract_strided_slice %79 {offsets = [0, 96], sizes = [8, 32], strides = [1, 1]} : vector<8x128xf32> to vector<8x32xf32>
    %85 = arith.mulf %82, %49 : vector<8x32xf32>
    %86 = arith.mulf %81, %83 : vector<8x32xf32>
    %87 = arith.addf %85, %86 : vector<8x32xf32>
    %88 = math.tanh %87 : vector<8x32xf32>
    %89 = arith.mulf %84, %88 : vector<8x32xf32>
    %90 = vector.extract_strided_slice %9 {offsets = [16, 0], sizes = [8, 128], strides = [1, 1]} : vector<64x128xf32> to vector<8x128xf32>
    %cst_27 = arith.constant dense<0.000000e+00> : vector<8x128xf32>
    %91 = tpu.matmul %69, %2, %cst_27 {dimension_numbers = #tpu.dot_dimension_numbers<[1], [0], [0], [1], [0, 0, 1, 1], [], []>} : vector<8x32xf32>, vector<32x128xf32>, vector<8x128xf32> -> vector<8x128xf32>
    %92 = arith.addf %90, %91 : vector<8x128xf32>
    %93 = arith.negf %92 : vector<8x128xf32>
    %94 = math.exp %93 : vector<8x128xf32>
    %cst_28 = arith.constant 1.000000e+00 : f32
    %95 = vector.broadcast %cst_28 : f32 to vector<8x128xf32>
    %96 = arith.addf %95, %94 : vector<8x128xf32>
    %97 = arith.divf %95, %96 : vector<8x128xf32>
    %98 = math.tanh %92 : vector<8x128xf32>
    %99 = vector.extract_strided_slice %97 {offsets = [0, 0], sizes = [8, 32], strides = [1, 1]} : vector<8x128xf32> to vector<8x32xf32>
    %100 = vector.extract_strided_slice %97 {offsets = [0, 32], sizes = [8, 32], strides = [1, 1]} : vector<8x128xf32> to vector<8x32xf32>
    %101 = vector.extract_strided_slice %98 {offsets = [0, 64], sizes = [8, 32], strides = [1, 1]} : vector<8x128xf32> to vector<8x32xf32>
    %102 = vector.extract_strided_slice %97 {offsets = [0, 96], sizes = [8, 32], strides = [1, 1]} : vector<8x128xf32> to vector<8x32xf32>
    %103 = arith.mulf %100, %67 : vector<8x32xf32>
    %104 = arith.mulf %99, %101 : vector<8x32xf32>
    %105 = arith.addf %103, %104 : vector<8x32xf32>
    %106 = math.tanh %105 : vector<8x32xf32>
    %107 = arith.mulf %102, %106 : vector<8x32xf32>
    %cst_29 = arith.constant dense<0.000000e+00> : vector<8x128xf32>
    %108 = tpu.matmul %107, %1, %cst_29 {dimension_numbers = #tpu.dot_dimension_numbers<[1], [0], [0], [1], [0, 0, 1, 1], [], []>} : vector<8x32xf32>, vector<32x128xf32>, vector<8x128xf32> -> vector<8x128xf32>
    %109 = vector.broadcast %5 : vector<1x128xf32> to vector<8x128xf32>
    %110 = arith.addf %108, %109 : vector<8x128xf32>
    %cst_30 = arith.constant dense<0.000000e+00> : vector<8x128xf32>
    %111 = tpu.matmul %89, %3, %cst_30 {dimension_numbers = #tpu.dot_dimension_numbers<[1], [0], [0], [1], [0, 0, 1, 1], [], []>} : vector<8x32xf32>, vector<32x128xf32>, vector<8x128xf32> -> vector<8x128xf32>
    %112 = arith.addf %110, %111 : vector<8x128xf32>
    %113 = arith.negf %112 : vector<8x128xf32>
    %114 = math.exp %113 : vector<8x128xf32>
    %cst_31 = arith.constant 1.000000e+00 : f32
    %115 = vector.broadcast %cst_31 : f32 to vector<8x128xf32>
    %116 = arith.addf %115, %114 : vector<8x128xf32>
    %117 = arith.divf %115, %116 : vector<8x128xf32>
    %118 = math.tanh %112 : vector<8x128xf32>
    %119 = vector.extract_strided_slice %117 {offsets = [0, 0], sizes = [8, 32], strides = [1, 1]} : vector<8x128xf32> to vector<8x32xf32>
    %120 = vector.extract_strided_slice %117 {offsets = [0, 32], sizes = [8, 32], strides = [1, 1]} : vector<8x128xf32> to vector<8x32xf32>
    %121 = vector.extract_strided_slice %118 {offsets = [0, 64], sizes = [8, 32], strides = [1, 1]} : vector<8x128xf32> to vector<8x32xf32>
    %122 = vector.extract_strided_slice %117 {offsets = [0, 96], sizes = [8, 32], strides = [1, 1]} : vector<8x128xf32> to vector<8x32xf32>
    %123 = arith.mulf %120, %87 : vector<8x32xf32>
    %124 = arith.mulf %119, %121 : vector<8x32xf32>
    %125 = arith.addf %123, %124 : vector<8x32xf32>
    %126 = math.tanh %125 : vector<8x32xf32>
    %127 = arith.mulf %122, %126 : vector<8x32xf32>
    %128 = vector.extract_strided_slice %9 {offsets = [24, 0], sizes = [8, 128], strides = [1, 1]} : vector<64x128xf32> to vector<8x128xf32>
    %cst_32 = arith.constant dense<0.000000e+00> : vector<8x128xf32>
    %129 = tpu.matmul %107, %2, %cst_32 {dimension_numbers = #tpu.dot_dimension_numbers<[1], [0], [0], [1], [0, 0, 1, 1], [], []>} : vector<8x32xf32>, vector<32x128xf32>, vector<8x128xf32> -> vector<8x128xf32>
    %130 = arith.addf %128, %129 : vector<8x128xf32>
    %131 = arith.negf %130 : vector<8x128xf32>
    %132 = math.exp %131 : vector<8x128xf32>
    %cst_33 = arith.constant 1.000000e+00 : f32
    %133 = vector.broadcast %cst_33 : f32 to vector<8x128xf32>
    %134 = arith.addf %133, %132 : vector<8x128xf32>
    %135 = arith.divf %133, %134 : vector<8x128xf32>
    %136 = math.tanh %130 : vector<8x128xf32>
    %137 = vector.extract_strided_slice %135 {offsets = [0, 0], sizes = [8, 32], strides = [1, 1]} : vector<8x128xf32> to vector<8x32xf32>
    %138 = vector.extract_strided_slice %135 {offsets = [0, 32], sizes = [8, 32], strides = [1, 1]} : vector<8x128xf32> to vector<8x32xf32>
    %139 = vector.extract_strided_slice %136 {offsets = [0, 64], sizes = [8, 32], strides = [1, 1]} : vector<8x128xf32> to vector<8x32xf32>
    %140 = vector.extract_strided_slice %135 {offsets = [0, 96], sizes = [8, 32], strides = [1, 1]} : vector<8x128xf32> to vector<8x32xf32>
    %141 = arith.mulf %138, %105 : vector<8x32xf32>
    %142 = arith.mulf %137, %139 : vector<8x32xf32>
    %143 = arith.addf %141, %142 : vector<8x32xf32>
    %144 = math.tanh %143 : vector<8x32xf32>
    %145 = arith.mulf %140, %144 : vector<8x32xf32>
    %cst_34 = arith.constant dense<0.000000e+00> : vector<8x128xf32>
    %146 = tpu.matmul %145, %1, %cst_34 {dimension_numbers = #tpu.dot_dimension_numbers<[1], [0], [0], [1], [0, 0, 1, 1], [], []>} : vector<8x32xf32>, vector<32x128xf32>, vector<8x128xf32> -> vector<8x128xf32>
    %147 = vector.broadcast %5 : vector<1x128xf32> to vector<8x128xf32>
    %148 = arith.addf %146, %147 : vector<8x128xf32>
    %cst_35 = arith.constant dense<0.000000e+00> : vector<8x128xf32>
    %149 = tpu.matmul %127, %3, %cst_35 {dimension_numbers = #tpu.dot_dimension_numbers<[1], [0], [0], [1], [0, 0, 1, 1], [], []>} : vector<8x32xf32>, vector<32x128xf32>, vector<8x128xf32> -> vector<8x128xf32>
    %150 = arith.addf %148, %149 : vector<8x128xf32>
    %151 = arith.negf %150 : vector<8x128xf32>
    %152 = math.exp %151 : vector<8x128xf32>
    %cst_36 = arith.constant 1.000000e+00 : f32
    %153 = vector.broadcast %cst_36 : f32 to vector<8x128xf32>
    %154 = arith.addf %153, %152 : vector<8x128xf32>
    %155 = arith.divf %153, %154 : vector<8x128xf32>
    %156 = math.tanh %150 : vector<8x128xf32>
    %157 = vector.extract_strided_slice %155 {offsets = [0, 0], sizes = [8, 32], strides = [1, 1]} : vector<8x128xf32> to vector<8x32xf32>
    %158 = vector.extract_strided_slice %155 {offsets = [0, 32], sizes = [8, 32], strides = [1, 1]} : vector<8x128xf32> to vector<8x32xf32>
    %159 = vector.extract_strided_slice %156 {offsets = [0, 64], sizes = [8, 32], strides = [1, 1]} : vector<8x128xf32> to vector<8x32xf32>
    %160 = vector.extract_strided_slice %155 {offsets = [0, 96], sizes = [8, 32], strides = [1, 1]} : vector<8x128xf32> to vector<8x32xf32>
    %161 = arith.mulf %158, %125 : vector<8x32xf32>
    %162 = arith.mulf %157, %159 : vector<8x32xf32>
    %163 = arith.addf %161, %162 : vector<8x32xf32>
    %164 = math.tanh %163 : vector<8x32xf32>
    %165 = arith.mulf %160, %164 : vector<8x32xf32>
    %166 = vector.extract_strided_slice %9 {offsets = [32, 0], sizes = [8, 128], strides = [1, 1]} : vector<64x128xf32> to vector<8x128xf32>
    %cst_37 = arith.constant dense<0.000000e+00> : vector<8x128xf32>
    %167 = tpu.matmul %145, %2, %cst_37 {dimension_numbers = #tpu.dot_dimension_numbers<[1], [0], [0], [1], [0, 0, 1, 1], [], []>} : vector<8x32xf32>, vector<32x128xf32>, vector<8x128xf32> -> vector<8x128xf32>
    %168 = arith.addf %166, %167 : vector<8x128xf32>
    %169 = arith.negf %168 : vector<8x128xf32>
    %170 = math.exp %169 : vector<8x128xf32>
    %cst_38 = arith.constant 1.000000e+00 : f32
    %171 = vector.broadcast %cst_38 : f32 to vector<8x128xf32>
    %172 = arith.addf %171, %170 : vector<8x128xf32>
    %173 = arith.divf %171, %172 : vector<8x128xf32>
    %174 = math.tanh %168 : vector<8x128xf32>
    %175 = vector.extract_strided_slice %173 {offsets = [0, 0], sizes = [8, 32], strides = [1, 1]} : vector<8x128xf32> to vector<8x32xf32>
    %176 = vector.extract_strided_slice %173 {offsets = [0, 32], sizes = [8, 32], strides = [1, 1]} : vector<8x128xf32> to vector<8x32xf32>
    %177 = vector.extract_strided_slice %174 {offsets = [0, 64], sizes = [8, 32], strides = [1, 1]} : vector<8x128xf32> to vector<8x32xf32>
    %178 = vector.extract_strided_slice %173 {offsets = [0, 96], sizes = [8, 32], strides = [1, 1]} : vector<8x128xf32> to vector<8x32xf32>
    %179 = arith.mulf %176, %143 : vector<8x32xf32>
    %180 = arith.mulf %175, %177 : vector<8x32xf32>
    %181 = arith.addf %179, %180 : vector<8x32xf32>
    %182 = math.tanh %181 : vector<8x32xf32>
    %183 = arith.mulf %178, %182 : vector<8x32xf32>
    %cst_39 = arith.constant dense<0.000000e+00> : vector<8x128xf32>
    %184 = tpu.matmul %183, %1, %cst_39 {dimension_numbers = #tpu.dot_dimension_numbers<[1], [0], [0], [1], [0, 0, 1, 1], [], []>} : vector<8x32xf32>, vector<32x128xf32>, vector<8x128xf32> -> vector<8x128xf32>
    %185 = vector.broadcast %5 : vector<1x128xf32> to vector<8x128xf32>
    %186 = arith.addf %184, %185 : vector<8x128xf32>
    %cst_40 = arith.constant dense<0.000000e+00> : vector<8x128xf32>
    %187 = tpu.matmul %165, %3, %cst_40 {dimension_numbers = #tpu.dot_dimension_numbers<[1], [0], [0], [1], [0, 0, 1, 1], [], []>} : vector<8x32xf32>, vector<32x128xf32>, vector<8x128xf32> -> vector<8x128xf32>
    %188 = arith.addf %186, %187 : vector<8x128xf32>
    %189 = arith.negf %188 : vector<8x128xf32>
    %190 = math.exp %189 : vector<8x128xf32>
    %cst_41 = arith.constant 1.000000e+00 : f32
    %191 = vector.broadcast %cst_41 : f32 to vector<8x128xf32>
    %192 = arith.addf %191, %190 : vector<8x128xf32>
    %193 = arith.divf %191, %192 : vector<8x128xf32>
    %194 = math.tanh %188 : vector<8x128xf32>
    %195 = vector.extract_strided_slice %193 {offsets = [0, 0], sizes = [8, 32], strides = [1, 1]} : vector<8x128xf32> to vector<8x32xf32>
    %196 = vector.extract_strided_slice %193 {offsets = [0, 32], sizes = [8, 32], strides = [1, 1]} : vector<8x128xf32> to vector<8x32xf32>
    %197 = vector.extract_strided_slice %194 {offsets = [0, 64], sizes = [8, 32], strides = [1, 1]} : vector<8x128xf32> to vector<8x32xf32>
    %198 = vector.extract_strided_slice %193 {offsets = [0, 96], sizes = [8, 32], strides = [1, 1]} : vector<8x128xf32> to vector<8x32xf32>
    %199 = arith.mulf %196, %163 : vector<8x32xf32>
    %200 = arith.mulf %195, %197 : vector<8x32xf32>
    %201 = arith.addf %199, %200 : vector<8x32xf32>
    %202 = math.tanh %201 : vector<8x32xf32>
    %203 = arith.mulf %198, %202 : vector<8x32xf32>
    %204 = vector.extract_strided_slice %9 {offsets = [40, 0], sizes = [8, 128], strides = [1, 1]} : vector<64x128xf32> to vector<8x128xf32>
    %cst_42 = arith.constant dense<0.000000e+00> : vector<8x128xf32>
    %205 = tpu.matmul %183, %2, %cst_42 {dimension_numbers = #tpu.dot_dimension_numbers<[1], [0], [0], [1], [0, 0, 1, 1], [], []>} : vector<8x32xf32>, vector<32x128xf32>, vector<8x128xf32> -> vector<8x128xf32>
    %206 = arith.addf %204, %205 : vector<8x128xf32>
    %207 = arith.negf %206 : vector<8x128xf32>
    %208 = math.exp %207 : vector<8x128xf32>
    %cst_43 = arith.constant 1.000000e+00 : f32
    %209 = vector.broadcast %cst_43 : f32 to vector<8x128xf32>
    %210 = arith.addf %209, %208 : vector<8x128xf32>
    %211 = arith.divf %209, %210 : vector<8x128xf32>
    %212 = math.tanh %206 : vector<8x128xf32>
    %213 = vector.extract_strided_slice %211 {offsets = [0, 0], sizes = [8, 32], strides = [1, 1]} : vector<8x128xf32> to vector<8x32xf32>
    %214 = vector.extract_strided_slice %211 {offsets = [0, 32], sizes = [8, 32], strides = [1, 1]} : vector<8x128xf32> to vector<8x32xf32>
    %215 = vector.extract_strided_slice %212 {offsets = [0, 64], sizes = [8, 32], strides = [1, 1]} : vector<8x128xf32> to vector<8x32xf32>
    %216 = vector.extract_strided_slice %211 {offsets = [0, 96], sizes = [8, 32], strides = [1, 1]} : vector<8x128xf32> to vector<8x32xf32>
    %217 = arith.mulf %214, %181 : vector<8x32xf32>
    %218 = arith.mulf %213, %215 : vector<8x32xf32>
    %219 = arith.addf %217, %218 : vector<8x32xf32>
    %220 = math.tanh %219 : vector<8x32xf32>
    %221 = arith.mulf %216, %220 : vector<8x32xf32>
    %cst_44 = arith.constant dense<0.000000e+00> : vector<8x128xf32>
    %222 = tpu.matmul %221, %1, %cst_44 {dimension_numbers = #tpu.dot_dimension_numbers<[1], [0], [0], [1], [0, 0, 1, 1], [], []>} : vector<8x32xf32>, vector<32x128xf32>, vector<8x128xf32> -> vector<8x128xf32>
    %223 = vector.broadcast %5 : vector<1x128xf32> to vector<8x128xf32>
    %224 = arith.addf %222, %223 : vector<8x128xf32>
    %cst_45 = arith.constant dense<0.000000e+00> : vector<8x128xf32>
    %225 = tpu.matmul %203, %3, %cst_45 {dimension_numbers = #tpu.dot_dimension_numbers<[1], [0], [0], [1], [0, 0, 1, 1], [], []>} : vector<8x32xf32>, vector<32x128xf32>, vector<8x128xf32> -> vector<8x128xf32>
    %226 = arith.addf %224, %225 : vector<8x128xf32>
    %227 = arith.negf %226 : vector<8x128xf32>
    %228 = math.exp %227 : vector<8x128xf32>
    %cst_46 = arith.constant 1.000000e+00 : f32
    %229 = vector.broadcast %cst_46 : f32 to vector<8x128xf32>
    %230 = arith.addf %229, %228 : vector<8x128xf32>
    %231 = arith.divf %229, %230 : vector<8x128xf32>
    %232 = math.tanh %226 : vector<8x128xf32>
    %233 = vector.extract_strided_slice %231 {offsets = [0, 0], sizes = [8, 32], strides = [1, 1]} : vector<8x128xf32> to vector<8x32xf32>
    %234 = vector.extract_strided_slice %231 {offsets = [0, 32], sizes = [8, 32], strides = [1, 1]} : vector<8x128xf32> to vector<8x32xf32>
    %235 = vector.extract_strided_slice %232 {offsets = [0, 64], sizes = [8, 32], strides = [1, 1]} : vector<8x128xf32> to vector<8x32xf32>
    %236 = vector.extract_strided_slice %231 {offsets = [0, 96], sizes = [8, 32], strides = [1, 1]} : vector<8x128xf32> to vector<8x32xf32>
    %237 = arith.mulf %234, %201 : vector<8x32xf32>
    %238 = arith.mulf %233, %235 : vector<8x32xf32>
    %239 = arith.addf %237, %238 : vector<8x32xf32>
    %240 = math.tanh %239 : vector<8x32xf32>
    %241 = arith.mulf %236, %240 : vector<8x32xf32>
    %242 = vector.extract_strided_slice %9 {offsets = [48, 0], sizes = [8, 128], strides = [1, 1]} : vector<64x128xf32> to vector<8x128xf32>
    %cst_47 = arith.constant dense<0.000000e+00> : vector<8x128xf32>
    %243 = tpu.matmul %221, %2, %cst_47 {dimension_numbers = #tpu.dot_dimension_numbers<[1], [0], [0], [1], [0, 0, 1, 1], [], []>} : vector<8x32xf32>, vector<32x128xf32>, vector<8x128xf32> -> vector<8x128xf32>
    %244 = arith.addf %242, %243 : vector<8x128xf32>
    %245 = arith.negf %244 : vector<8x128xf32>
    %246 = math.exp %245 : vector<8x128xf32>
    %cst_48 = arith.constant 1.000000e+00 : f32
    %247 = vector.broadcast %cst_48 : f32 to vector<8x128xf32>
    %248 = arith.addf %247, %246 : vector<8x128xf32>
    %249 = arith.divf %247, %248 : vector<8x128xf32>
    %250 = math.tanh %244 : vector<8x128xf32>
    %251 = vector.extract_strided_slice %249 {offsets = [0, 0], sizes = [8, 32], strides = [1, 1]} : vector<8x128xf32> to vector<8x32xf32>
    %252 = vector.extract_strided_slice %249 {offsets = [0, 32], sizes = [8, 32], strides = [1, 1]} : vector<8x128xf32> to vector<8x32xf32>
    %253 = vector.extract_strided_slice %250 {offsets = [0, 64], sizes = [8, 32], strides = [1, 1]} : vector<8x128xf32> to vector<8x32xf32>
    %254 = vector.extract_strided_slice %249 {offsets = [0, 96], sizes = [8, 32], strides = [1, 1]} : vector<8x128xf32> to vector<8x32xf32>
    %255 = arith.mulf %252, %219 : vector<8x32xf32>
    %256 = arith.mulf %251, %253 : vector<8x32xf32>
    %257 = arith.addf %255, %256 : vector<8x32xf32>
    %258 = math.tanh %257 : vector<8x32xf32>
    %259 = arith.mulf %254, %258 : vector<8x32xf32>
    %cst_49 = arith.constant dense<0.000000e+00> : vector<8x128xf32>
    %260 = tpu.matmul %259, %1, %cst_49 {dimension_numbers = #tpu.dot_dimension_numbers<[1], [0], [0], [1], [0, 0, 1, 1], [], []>} : vector<8x32xf32>, vector<32x128xf32>, vector<8x128xf32> -> vector<8x128xf32>
    %261 = vector.broadcast %5 : vector<1x128xf32> to vector<8x128xf32>
    %262 = arith.addf %260, %261 : vector<8x128xf32>
    %cst_50 = arith.constant dense<0.000000e+00> : vector<8x128xf32>
    %263 = tpu.matmul %241, %3, %cst_50 {dimension_numbers = #tpu.dot_dimension_numbers<[1], [0], [0], [1], [0, 0, 1, 1], [], []>} : vector<8x32xf32>, vector<32x128xf32>, vector<8x128xf32> -> vector<8x128xf32>
    %264 = arith.addf %262, %263 : vector<8x128xf32>
    %265 = arith.negf %264 : vector<8x128xf32>
    %266 = math.exp %265 : vector<8x128xf32>
    %cst_51 = arith.constant 1.000000e+00 : f32
    %267 = vector.broadcast %cst_51 : f32 to vector<8x128xf32>
    %268 = arith.addf %267, %266 : vector<8x128xf32>
    %269 = arith.divf %267, %268 : vector<8x128xf32>
    %270 = math.tanh %264 : vector<8x128xf32>
    %271 = vector.extract_strided_slice %269 {offsets = [0, 0], sizes = [8, 32], strides = [1, 1]} : vector<8x128xf32> to vector<8x32xf32>
    %272 = vector.extract_strided_slice %269 {offsets = [0, 32], sizes = [8, 32], strides = [1, 1]} : vector<8x128xf32> to vector<8x32xf32>
    %273 = vector.extract_strided_slice %270 {offsets = [0, 64], sizes = [8, 32], strides = [1, 1]} : vector<8x128xf32> to vector<8x32xf32>
    %274 = vector.extract_strided_slice %269 {offsets = [0, 96], sizes = [8, 32], strides = [1, 1]} : vector<8x128xf32> to vector<8x32xf32>
    %275 = arith.mulf %272, %239 : vector<8x32xf32>
    %276 = arith.mulf %271, %273 : vector<8x32xf32>
    %277 = arith.addf %275, %276 : vector<8x32xf32>
    %278 = math.tanh %277 : vector<8x32xf32>
    %279 = arith.mulf %274, %278 : vector<8x32xf32>
    %280 = vector.extract_strided_slice %9 {offsets = [56, 0], sizes = [8, 128], strides = [1, 1]} : vector<64x128xf32> to vector<8x128xf32>
    %cst_52 = arith.constant dense<0.000000e+00> : vector<8x128xf32>
    %281 = tpu.matmul %259, %2, %cst_52 {dimension_numbers = #tpu.dot_dimension_numbers<[1], [0], [0], [1], [0, 0, 1, 1], [], []>} : vector<8x32xf32>, vector<32x128xf32>, vector<8x128xf32> -> vector<8x128xf32>
    %282 = arith.addf %280, %281 : vector<8x128xf32>
    %283 = arith.negf %282 : vector<8x128xf32>
    %284 = math.exp %283 : vector<8x128xf32>
    %cst_53 = arith.constant 1.000000e+00 : f32
    %285 = vector.broadcast %cst_53 : f32 to vector<8x128xf32>
    %286 = arith.addf %285, %284 : vector<8x128xf32>
    %287 = arith.divf %285, %286 : vector<8x128xf32>
    %288 = math.tanh %282 : vector<8x128xf32>
    %289 = vector.extract_strided_slice %287 {offsets = [0, 0], sizes = [8, 32], strides = [1, 1]} : vector<8x128xf32> to vector<8x32xf32>
    %290 = vector.extract_strided_slice %287 {offsets = [0, 32], sizes = [8, 32], strides = [1, 1]} : vector<8x128xf32> to vector<8x32xf32>
    %291 = vector.extract_strided_slice %288 {offsets = [0, 64], sizes = [8, 32], strides = [1, 1]} : vector<8x128xf32> to vector<8x32xf32>
    %292 = vector.extract_strided_slice %287 {offsets = [0, 96], sizes = [8, 32], strides = [1, 1]} : vector<8x128xf32> to vector<8x32xf32>
    %293 = arith.mulf %290, %257 : vector<8x32xf32>
    %294 = arith.mulf %289, %291 : vector<8x32xf32>
    %295 = arith.addf %293, %294 : vector<8x32xf32>
    %296 = math.tanh %295 : vector<8x32xf32>
    %297 = arith.mulf %292, %296 : vector<8x32xf32>
    %cst_54 = arith.constant dense<0.000000e+00> : vector<8x128xf32>
    %298 = tpu.matmul %297, %1, %cst_54 {dimension_numbers = #tpu.dot_dimension_numbers<[1], [0], [0], [1], [0, 0, 1, 1], [], []>} : vector<8x32xf32>, vector<32x128xf32>, vector<8x128xf32> -> vector<8x128xf32>
    %299 = vector.broadcast %5 : vector<1x128xf32> to vector<8x128xf32>
    %300 = arith.addf %298, %299 : vector<8x128xf32>
    %cst_55 = arith.constant dense<0.000000e+00> : vector<8x128xf32>
    %301 = tpu.matmul %279, %3, %cst_55 {dimension_numbers = #tpu.dot_dimension_numbers<[1], [0], [0], [1], [0, 0, 1, 1], [], []>} : vector<8x32xf32>, vector<32x128xf32>, vector<8x128xf32> -> vector<8x128xf32>
    %302 = arith.addf %300, %301 : vector<8x128xf32>
    %303 = arith.negf %302 : vector<8x128xf32>
    %304 = math.exp %303 : vector<8x128xf32>
    %cst_56 = arith.constant 1.000000e+00 : f32
    %305 = vector.broadcast %cst_56 : f32 to vector<8x128xf32>
    %306 = arith.addf %305, %304 : vector<8x128xf32>
    %307 = arith.divf %305, %306 : vector<8x128xf32>
    %308 = math.tanh %302 : vector<8x128xf32>
    %309 = vector.extract_strided_slice %307 {offsets = [0, 0], sizes = [8, 32], strides = [1, 1]} : vector<8x128xf32> to vector<8x32xf32>
    %310 = vector.extract_strided_slice %307 {offsets = [0, 32], sizes = [8, 32], strides = [1, 1]} : vector<8x128xf32> to vector<8x32xf32>
    %311 = vector.extract_strided_slice %308 {offsets = [0, 64], sizes = [8, 32], strides = [1, 1]} : vector<8x128xf32> to vector<8x32xf32>
    %312 = vector.extract_strided_slice %307 {offsets = [0, 96], sizes = [8, 32], strides = [1, 1]} : vector<8x128xf32> to vector<8x32xf32>
    %313 = arith.mulf %310, %277 : vector<8x32xf32>
    %314 = arith.mulf %309, %311 : vector<8x32xf32>
    %315 = arith.addf %313, %314 : vector<8x32xf32>
    %316 = math.tanh %315 : vector<8x32xf32>
    %317 = arith.mulf %312, %316 : vector<8x32xf32>
    %c0_57 = arith.constant 0 : index
    %c0_58 = arith.constant 0 : index
    %318 = vector.load %arg7[%c0_57, %c0_58] : memref<32x4xf32, #tpu.memory_space<vmem>>, vector<32x4xf32>
    %cst_59 = arith.constant dense<0.000000e+00> : vector<8x4xf32>
    %319 = tpu.matmul %317, %318, %cst_59 {dimension_numbers = #tpu.dot_dimension_numbers<[1], [0], [0], [1], [0, 0, 1, 1], [], []>} : vector<8x32xf32>, vector<32x4xf32>, vector<8x4xf32> -> vector<8x4xf32>
    %c0_60 = arith.constant 0 : index
    %c0_61 = arith.constant 0 : index
    %320 = vector.load %arg8[%c0_60, %c0_61] : memref<1x4xf32, #tpu.memory_space<vmem>>, vector<1x4xf32>
    %321 = vector.broadcast %320 : vector<1x4xf32> to vector<8x4xf32>
    %322 = arith.addf %319, %321 : vector<8x4xf32>
    %c0_62 = arith.constant 0 : index
    %c0_63 = arith.constant 0 : index
    %323 = vector.load %arg9[%c0_62, %c0_63] : memref<8x4xf32, #tpu.memory_space<vmem>>, vector<8x4xf32>
    tpu.vector_store %arg9[%c0_62, %c0_63], %322 {strides = array<i32>} : memref<8x4xf32, #tpu.memory_space<vmem>>, vector<8x4xf32>,
    return
  }
}

</mosaic_0001>

<llo_original>
// kernel: vanilla_lstm_forward.1
$region0: #{vanilla_lstm_forward.1}
  #allocation0 [shape = 'u32[]', space=smem, size = 0x4, offset = 0x4, fixed_abs, tag = 'smem constant byte address 0x4 - core index']
  #allocation1 [shape = 'u32[72,128]{1,0:T(1,128)}', space=vmem, size = 0x9000, scoped, tag = 'internal scratch']
  %s0 = inlined_call_operand.vmem [shape: f32[64,8], index: 0, kind: input, shape index: {}]
  %s1 = inlined_call_operand.vmem [shape: f32[8,128], index: 1, kind: input, shape index: {}]
  %s2 = inlined_call_operand.vmem [shape: f32[32,128], index: 2, kind: input, shape index: {}]
  %s3 = inlined_call_operand.vmem [shape: f32[1,128], index: 3, kind: input, shape index: {}]
  %s4 = inlined_call_operand.vmem [shape: f32[32,128], index: 4, kind: input, shape index: {}]
  %s5 = inlined_call_operand.vmem [shape: f32[32,128], index: 5, kind: input, shape index: {}]
  %s6 = inlined_call_operand.vmem [shape: f32[1,128], index: 6, kind: input, shape index: {}]
  %s7 = inlined_call_operand.vmem [shape: f32[32,4], index: 7, kind: input, shape index: {}]
  %s8 = inlined_call_operand.vmem [shape: f32[1,4], index: 8, kind: input, shape index: {}]
  %s9 = inlined_call_operand.vmem [shape: f32[8,4], index: 9, kind: output, shape index: {}]
  %s10 = sld [smem:[#allocation0]]
  $region46: #{vanilla_lstm_forward.1} parent=0
    _
  %s12 = ssub.s32 1, %s10
  %s13 = scalar_select 0, %s12, %s10
  // Predicated region
  $region2: #{vanilla_lstm_forward.1} parent=0 // pred_check
    _
  $region3: #{vanilla_lstm_forward.1} parent=0 // pred_check_branch
    %15 = sbr.rel (0) target = $region5
  $region4: #{vanilla_lstm_forward.1} parent=0 // pred_region
    _
  $region5: #{vanilla_lstm_forward.1} parent=0 // pred_fallthru
    _
  // Predicated region
  $region6: #{vanilla_lstm_forward.1} parent=0 // pred_check
    _
  $region7: #{vanilla_lstm_forward.1} parent=0 // pred_check_branch
    %17 = sbr.rel (0) target = $region9
  $region8: #{vanilla_lstm_forward.1} parent=0 // pred_region
    _
  $region9: #{vanilla_lstm_forward.1} parent=0 // pred_fallthru
    _
  // Predicated region
  $region10: #{vanilla_lstm_forward.1} parent=0 // pred_check
    _
  $region11: #{vanilla_lstm_forward.1} parent=0 // pred_check_branch
    %19 = sbr.rel (0) target = $region13
  $region12: #{vanilla_lstm_forward.1} parent=0 // pred_region
    _
  $region13: #{vanilla_lstm_forward.1} parent=0 // pred_fallthru
    _
  // Predicated region
  $region14: #{vanilla_lstm_forward.1} parent=0 // pred_check
    _
  $region15: #{vanilla_lstm_forward.1} parent=0 // pred_check_branch
    %21 = sbr.rel (0) target = $region17
  $region16: #{vanilla_lstm_forward.1} parent=0 // pred_region
    _
  $region17: #{vanilla_lstm_forward.1} parent=0 // pred_fallthru
    _
  // Predicated region
  $region18: #{vanilla_lstm_forward.1} parent=0 // pred_check
    _
  $region19: #{vanilla_lstm_forward.1} parent=0 // pred_check_branch
    %23 = sbr.rel (0) target = $region21
  $region20: #{vanilla_lstm_forward.1} parent=0 // pred_region
    _
  $region21: #{vanilla_lstm_forward.1} parent=0 // pred_fallthru
    _
  // Predicated region
  $region22: #{vanilla_lstm_forward.1} parent=0 // pred_check
    _
  $region23: #{vanilla_lstm_forward.1} parent=0 // pred_check_branch
    %25 = sbr.rel (0) target = $region25
  $region24: #{vanilla_lstm_forward.1} parent=0 // pred_region
    _
  $region25: #{vanilla_lstm_forward.1} parent=0 // pred_fallthru
    _
  // Predicated region
  $region26: #{vanilla_lstm_forward.1} parent=0 // pred_check
    _
  $region27: #{vanilla_lstm_forward.1} parent=0 // pred_check_branch
    %27 = sbr.rel (0) target = $region29
  $region28: #{vanilla_lstm_forward.1} parent=0 // pred_region
    _
  $region29: #{vanilla_lstm_forward.1} parent=0 // pred_fallthru
    _
  // Predicated region
  $region30: #{vanilla_lstm_forward.1} parent=0 // pred_check
    _
  $region31: #{vanilla_lstm_forward.1} parent=0 // pred_check_branch
    %29 = sbr.rel (0) target = $region33
  $region32: #{vanilla_lstm_forward.1} parent=0 // pred_region
    _
  $region33: #{vanilla_lstm_forward.1} parent=0 // pred_fallthru
    _
  // Predicated region
  $region34: #{vanilla_lstm_forward.1} parent=0 // pred_check
    _
  $region35: #{vanilla_lstm_forward.1} parent=0 // pred_check_branch
    %31 = sbr.rel (0) target = $region37
  $region36: #{vanilla_lstm_forward.1} parent=0 // pred_region
    _
  $region37: #{vanilla_lstm_forward.1} parent=0 // pred_fallthru
    _
  %v32 = vld [vmem:[%s1] sm:$0xff]
  %v33 = vld [vmem:[%s4] sm:$0xff]
  %v34 = vld [vmem:[%s4 + $0x8] sm:$0xff]
  %v35 = vld [vmem:[%s4 + $0x10] sm:$0xff]
  %v36 = vld [vmem:[%s4 + $0x18] sm:$0xff]
  %v37 = vld [vmem:[%s2] sm:$0xff]
  %v38 = vld [vmem:[%s2 + $0x8] sm:$0xff]
  %v39 = vld [vmem:[%s2 + $0x10] sm:$0xff]
  %v40 = vld [vmem:[%s2 + $0x18] sm:$0xff]
  %v41 = vld [vmem:[%s5] sm:$0xff]
  %v42 = vld [vmem:[%s5 + $0x8] sm:$0xff]
  %v43 = vld [vmem:[%s5 + $0x10] sm:$0xff]
  %v44 = vld [vmem:[%s5 + $0x18] sm:$0xff]
  %v45 = vld [vmem:[%s3] sm:$0x1]
  %v46 = vld [vmem:[%s6] sm:$0x1]
  %v47 = vld [vmem:[%s0] sm:$0xff]
  %v48 = vld [vmem:[%s0 + $0x8] sm:$0xff]
  %v49 = vld [vmem:[%s0 + $0x10] sm:$0xff]
  %v50 = vld [vmem:[%s0 + $0x18] sm:$0xff]
  %v51 = vld [vmem:[%s0 + $0x20] sm:$0xff]
  %v52 = vld [vmem:[%s0 + $0x28] sm:$0xff]
  %v53 = vld [vmem:[%s0 + $0x30] sm:$0xff]
  %v54 = vld [vmem:[%s0 + $0x38] sm:$0xff]
  %v56 = vperm.slane %v45, 0
  %vm58 = vcmask 64512
  %v60 = vsel %vm58, %v47, 0
  %v63 = vsel %vm58, %v48, 0
  %v66 = vsel %vm58, %v49, 0
  %v69 = vsel %vm58, %v50, 0
  %v72 = vsel %vm58, %v51, 0
  %v75 = vsel %vm58, %v52, 0
  %v78 = vsel %vm58, %v53, 0
  %v81 = vsel %vm58, %v54, 0
  %83 = vmatpush.msra.mxu0 0.0
  %84 = vmatpush.msra.mxu0 0.0
  %85 = vmatpush.msra.mxu0 0.0
  %86 = vmatpush.msra.mxu0 0.0
  %87 = vmatpush.msra.mxu0 0.0
  %88 = vmatpush.msra.mxu0 0.0
  %89 = vmatpush.msra.mxu0 0.0
  %90 = vmatpush.msra.mxu0 0.0
  %91 = vmatpush.msra.mxu0 0.0
  %92 = vmatpush.msra.mxu0 0.0
  %93 = vmatpush.msra.mxu0 0.0
  %94 = vmatpush.msra.mxu0 0.0
  %95 = vmatpush.msra.mxu0 0.0
  %96 = vmatpush.msra.mxu0 0.0
  %97 = vmatpush.msra.mxu0 0.0
  %98 = vmatpush.msra.mxu0 %v32
  %99 = vmatmul.f32.gmra.mxu0 %v60
  %v100 = vpop.f32.mrf.mxu0
  %v101 = vadd.f32 %v56, %v100
  %102 = vmatmul.f32.gmra.mxu0 %v63
  %v103 = vpop.f32.mrf.mxu0
  %v104 = vadd.f32 %v56, %v103
  %105 = vmatmul.f32.gmra.mxu0 %v66
  %v106 = vpop.f32.mrf.mxu0
  %v107 = vadd.f32 %v56, %v106
  %108 = vmatmul.f32.gmra.mxu0 %v69
  %v109 = vpop.f32.mrf.mxu0
  %v110 = vadd.f32 %v56, %v109
  %111 = vmatmul.f32.gmra.mxu0 %v72
  %v112 = vpop.f32.mrf.mxu0
  %v113 = vadd.f32 %v56, %v112
  %114 = vmatmul.f32.gmra.mxu0 %v75
  %v115 = vpop.f32.mrf.mxu0
  %v116 = vadd.f32 %v56, %v115
  %117 = vmatmul.f32.gmra.mxu0 %v78
  %v118 = vpop.f32.mrf.mxu0
  %v119 = vadd.f32 %v56, %v118
  %120 = vmatmul.f32.gmra.mxu0 %v81
  %v121 = vpop.f32.mrf.mxu0
  %v122 = vadd.f32 %v56, %v121
  %123 = vdwg.mxu0
  %vm124 = vcmask 261120
  %v126 = vsel %vm124, 0.0, 0
  %128 = vmatpush.msra.mxu0 0.0
  %129 = vmatpush.msra.mxu0 0.0
  %130 = vmatpush.msra.mxu0 0.0
  %131 = vmatpush.msra.mxu0 0.0
  %132 = vmatpush.msra.mxu0 0.0
  %133 = vmatpush.msra.mxu0 0.0
  %134 = vmatpush.msra.mxu0 0.0
  %135 = vmatpush.msra.mxu0 0.0
  %136 = vmatpush.msra.mxu0 0.0
  %137 = vmatpush.msra.mxu0 0.0
  %138 = vmatpush.msra.mxu0 0.0
  %139 = vmatpush.msra.mxu0 0.0
  %140 = vmatpush.msra.mxu0 %v40
  %141 = vmatpush.msra.mxu0 %v39
  %142 = vmatpush.msra.mxu0 %v38
  %143 = vmatpush.msra.mxu0 %v37
  %144 = vmatmul.f32.gmra.mxu0 %v126
  %v145 = vpop.f32.mrf.mxu0
  %v146 = vadd.f32 0.0, %v145
  %147 = vdwg.mxu0
  %v148 = vadd.f32 %v101, %v146
  %v149 = vxor.u32 %v148, 2147483648
  %v150 = vmul.f32 %v149, 1.442695
  %v151 = vpow.pop %v150
  %v152 = vadd.f32 %v151, 1.0
  %v153 = vrcp.pop %v152
  %v154 = vmul.f32 %v152, %v153
  %v155 = vsub.f32 1.0, %v154
  %v156 = vmul.f32 %v153, %v155
  %v157 = vadd.f32 %v153, %v156
  %vm158 = vweird.f32 %v152
  %vm159 = vweird.f32 %v153
  %vm160 = vmor %vm158, %vm159
  %v161 = vsel %vm160, %v153, %v157
  %v162 = vand.u32 2147483647, %v152
  %vm163 = vcmp.eq.f32.partialorder %v162, 8.507059e+37
  %v164 = vand.u32 %v152, 2147483648
  %v165 = vor.u32 1.1754944e-38, %v164
  %v166 = vsel %vm163, %v165, %v161
  %v167 = vmul.f32 1.0, %v166
  %v168 = vtanh.pop %v148
  %v169 = vmul.f32 %v167, 0.0
  %171 = vrot.lane.b32.xlu0 %v168, 64
  %v172 = vpop.permute.xlu0 %171
  %v174 = vmul.f32 %v167, %v172
  %176 = vrot.lane.b32.xlu0 %v174, 32
  %v177 = vpop.permute.xlu0 %176
  %v179 = vadd.f32 %v169, %v177
  %v180 = vtanh.pop %v179
  %182 = vrot.lane.b32.xlu0 %v180, 64
  %v183 = vpop.permute.xlu0 %182
  %v185 = vmul.f32 %v167, %v183
  %v187 = vperm.slane %v46, 0
  %190 = vrot.lane.b32.xlu0 %v185, 32
  %v191 = vpop.permute.xlu0 %190
  %v192 = vsel %vm124, %v191, 0
  %194 = vmatpush.msra.mxu0 0.0
  %195 = vmatpush.msra.mxu0 0.0
  %196 = vmatpush.msra.mxu0 0.0
  %197 = vmatpush.msra.mxu0 0.0
  %198 = vmatpush.msra.mxu0 0.0
  %199 = vmatpush.msra.mxu0 0.0
  %200 = vmatpush.msra.mxu0 0.0
  %201 = vmatpush.msra.mxu0 0.0
  %202 = vmatpush.msra.mxu0 0.0
  %203 = vmatpush.msra.mxu0 0.0
  %204 = vmatpush.msra.mxu0 0.0
  %205 = vmatpush.msra.mxu0 0.0
  %206 = vmatpush.msra.mxu0 %v36
  %207 = vmatpush.msra.mxu0 %v35
  %208 = vmatpush.msra.mxu0 %v34
  %209 = vmatpush.msra.mxu0 %v33
  %210 = vmatmul.f32.gmra.mxu0 %v192
  %v211 = vpop.f32.mrf.mxu0
  %v212 = vadd.f32 %v187, %v211
  %213 = vdwg.mxu0
  %214 = vmatpush.msra.mxu0 0.0
  %215 = vmatpush.msra.mxu0 0.0
  %216 = vmatpush.msra.mxu0 0.0
  %217 = vmatpush.msra.mxu0 0.0
  %218 = vmatpush.msra.mxu0 0.0
  %219 = vmatpush.msra.mxu0 0.0
  %220 = vmatpush.msra.mxu0 0.0
  %221 = vmatpush.msra.mxu0 0.0
  %222 = vmatpush.msra.mxu0 0.0
  %223 = vmatpush.msra.mxu0 0.0
  %224 = vmatpush.msra.mxu0 0.0
  %225 = vmatpush.msra.mxu0 0.0
  %226 = vmatpush.msra.mxu0 %v44
  %227 = vmatpush.msra.mxu0 %v43
  %228 = vmatpush.msra.mxu0 %v42
  %229 = vmatpush.msra.mxu0 %v41
  %230 = vmatmul.f32.gmra.mxu0 %v126
  %v231 = vpop.f32.mrf.mxu0
  %v232 = vadd.f32 0.0, %v231
  %233 = vdwg.mxu0
  %v234 = vadd.f32 %v212, %v232
  %v235 = vxor.u32 %v234, 2147483648
  %v236 = vmul.f32 %v235, 1.442695
  %v237 = vpow.pop %v236
  %v238 = vadd.f32 %v237, 1.0
  %v239 = vrcp.pop %v238
  %v240 = vmul.f32 %v238, %v239
  %v241 = vsub.f32 1.0, %v240
  %v242 = vmul.f32 %v239, %v241
  %v243 = vadd.f32 %v239, %v242
  %vm244 = vweird.f32 %v238
  %vm245 = vweird.f32 %v239
  %vm246 = vmor %vm244, %vm245
  %v247 = vsel %vm246, %v239, %v243
  %v248 = vand.u32 2147483647, %v238
  %vm249 = vcmp.eq.f32.partialorder %v248, 8.507059e+37
  %v250 = vand.u32 %v238, 2147483648
  %v251 = vor.u32 1.1754944e-38, %v250
  %v252 = vsel %vm249, %v251, %v247
  %v253 = vmul.f32 1.0, %v252
  %v254 = vtanh.pop %v234
  %v255 = vmul.f32 %v253, 0.0
  %257 = vrot.lane.b32.xlu0 %v254, 64
  %v258 = vpop.permute.xlu0 %257
  %v260 = vmul.f32 %v253, %v258
  %262 = vrot.lane.b32.xlu0 %v260, 32
  %v263 = vpop.permute.xlu0 %262
  %v265 = vadd.f32 %v255, %v263
  %v266 = vtanh.pop %v265
  %268 = vrot.lane.b32.xlu0 %v266, 64
  %v269 = vpop.permute.xlu0 %268
  %v271 = vmul.f32 %v253, %v269
  %272 = vmatpush.msra.mxu0 0.0
  %273 = vmatpush.msra.mxu0 0.0
  %274 = vmatpush.msra.mxu0 0.0
  %275 = vmatpush.msra.mxu0 0.0
  %276 = vmatpush.msra.mxu0 0.0
  %277 = vmatpush.msra.mxu0 0.0
  %278 = vmatpush.msra.mxu0 0.0
  %279 = vmatpush.msra.mxu0 0.0
  %280 = vmatpush.msra.mxu0 0.0
  %281 = vmatpush.msra.mxu0 0.0
  %282 = vmatpush.msra.mxu0 0.0
  %283 = vmatpush.msra.mxu0 0.0
  %284 = vmatpush.msra.mxu0 %v40
  %285 = vmatpush.msra.mxu0 %v39
  %286 = vmatpush.msra.mxu0 %v38
  %287 = vmatpush.msra.mxu0 %v37
  %288 = vmatmul.f32.gmra.mxu0 %v192
  %v289 = vpop.f32.mrf.mxu0
  %v290 = vadd.f32 0.0, %v289
  %291 = vdwg.mxu0
  %v292 = vadd.f32 %v104, %v290
  %v293 = vxor.u32 %v292, 2147483648
  %v294 = vmul.f32 %v293, 1.442695
  %v295 = vpow.pop %v294
  %v296 = vadd.f32 %v295, 1.0
  %v297 = vrcp.pop %v296
  %v298 = vmul.f32 %v296, %v297
  %v299 = vsub.f32 1.0, %v298
  %v300 = vmul.f32 %v297, %v299
  %v301 = vadd.f32 %v297, %v300
  %vm302 = vweird.f32 %v296
  %vm303 = vweird.f32 %v297
  %vm304 = vmor %vm302, %vm303
  %v305 = vsel %vm304, %v297, %v301
  %v306 = vand.u32 2147483647, %v296
  %vm307 = vcmp.eq.f32.partialorder %v306, 8.507059e+37
  %v308 = vand.u32 %v296, 2147483648
  %v309 = vor.u32 1.1754944e-38, %v308
  %v310 = vsel %vm307, %v309, %v305
  %v311 = vmul.f32 1.0, %v310
  %v312 = vtanh.pop %v292
  %v313 = vmul.f32 %v311, %v179
  %315 = vrot.lane.b32.xlu0 %v312, 64
  %v316 = vpop.permute.xlu0 %315
  %v318 = vmul.f32 %v311, %v316
  %320 = vrot.lane.b32.xlu0 %v318, 32
  %v321 = vpop.permute.xlu0 %320
  %v323 = vadd.f32 %v313, %v321
  %v324 = vtanh.pop %v323
  %326 = vrot.lane.b32.xlu0 %v324, 64
  %v327 = vpop.permute.xlu0 %326
  %v329 = vmul.f32 %v311, %v327
  %331 = vrot.lane.b32.xlu0 %v329, 32
  %v332 = vpop.permute.xlu0 %331
  %v333 = vsel %vm124, %v332, 0
  %335 = vmatpush.msra.mxu0 0.0
  %336 = vmatpush.msra.mxu0 0.0
  %337 = vmatpush.msra.mxu0 0.0
  %338 = vmatpush.msra.mxu0 0.0
  %339 = vmatpush.msra.mxu0 0.0
  %340 = vmatpush.msra.mxu0 0.0
  %341 = vmatpush.msra.mxu0 0.0
  %342 = vmatpush.msra.mxu0 0.0
  %343 = vmatpush.msra.mxu0 0.0
  %344 = vmatpush.msra.mxu0 0.0
  %345 = vmatpush.msra.mxu0 0.0
  %346 = vmatpush.msra.mxu0 0.0
  %347 = vmatpush.msra.mxu0 %v36
  %348 = vmatpush.msra.mxu0 %v35
  %349 = vmatpush.msra.mxu0 %v34
  %350 = vmatpush.msra.mxu0 %v33
  %351 = vmatmul.f32.gmra.mxu0 %v333
  %v352 = vpop.f32.mrf.mxu0
  %v353 = vadd.f32 %v187, %v352
  %354 = vdwg.mxu0
  %356 = vrot.lane.b32.xlu0 %v271, 32
  %v357 = vpop.permute.xlu0 %356
  %v358 = vsel %vm124, %v357, 0
  %360 = vmatpush.msra.mxu0 0.0
  %361 = vmatpush.msra.mxu0 0.0
  %362 = vmatpush.msra.mxu0 0.0
  %363 = vmatpush.msra.mxu0 0.0
  %364 = vmatpush.msra.mxu0 0.0
  %365 = vmatpush.msra.mxu0 0.0
  %366 = vmatpush.msra.mxu0 0.0
  %367 = vmatpush.msra.mxu0 0.0
  %368 = vmatpush.msra.mxu0 0.0
  %369 = vmatpush.msra.mxu0 0.0
  %370 = vmatpush.msra.mxu0 0.0
  %371 = vmatpush.msra.mxu0 0.0
  %372 = vmatpush.msra.mxu0 %v44
  %373 = vmatpush.msra.mxu0 %v43
  %374 = vmatpush.msra.mxu0 %v42
  %375 = vmatpush.msra.mxu0 %v41
  %376 = vmatmul.f32.gmra.mxu0 %v358
  %v377 = vpop.f32.mrf.mxu0
  %v378 = vadd.f32 0.0, %v377
  %379 = vdwg.mxu0
  %v380 = vadd.f32 %v353, %v378
  %v381 = vxor.u32 %v380, 2147483648
  %v382 = vmul.f32 %v381, 1.442695
  %v383 = vpow.pop %v382
  %v384 = vadd.f32 %v383, 1.0
  %v385 = vrcp.pop %v384
  %v386 = vmul.f32 %v384, %v385
  %v387 = vsub.f32 1.0, %v386
  %v388 = vmul.f32 %v385, %v387
  %v389 = vadd.f32 %v385, %v388
  %vm390 = vweird.f32 %v384
  %vm391 = vweird.f32 %v385
  %vm392 = vmor %vm390, %vm391
  %v393 = vsel %vm392, %v385, %v389
  %v394 = vand.u32 2147483647, %v384
  %vm395 = vcmp.eq.f32.partialorder %v394, 8.507059e+37
  %v396 = vand.u32 %v384, 2147483648
  %v397 = vor.u32 1.1754944e-38, %v396
  %v398 = vsel %vm395, %v397, %v393
  %v399 = vmul.f32 1.0, %v398
  %v400 = vtanh.pop %v380
  %v401 = vmul.f32 %v399, %v265
  %403 = vrot.lane.b32.xlu0 %v400, 64
  %v404 = vpop.permute.xlu0 %403
  %v406 = vmul.f32 %v399, %v404
  %408 = vrot.lane.b32.xlu0 %v406, 32
  %v409 = vpop.permute.xlu0 %408
  %v411 = vadd.f32 %v401, %v409
  %v412 = vtanh.pop %v411
  %414 = vrot.lane.b32.xlu0 %v412, 64
  %v415 = vpop.permute.xlu0 %414
  %v417 = vmul.f32 %v399, %v415
  %418 = vmatpush.msra.mxu0 0.0
  %419 = vmatpush.msra.mxu0 0.0
  %420 = vmatpush.msra.mxu0 0.0
  %421 = vmatpush.msra.mxu0 0.0
  %422 = vmatpush.msra.mxu0 0.0
  %423 = vmatpush.msra.mxu0 0.0
  %424 = vmatpush.msra.mxu0 0.0
  %425 = vmatpush.msra.mxu0 0.0
  %426 = vmatpush.msra.mxu0 0.0
  %427 = vmatpush.msra.mxu0 0.0
  %428 = vmatpush.msra.mxu0 0.0
  %429 = vmatpush.msra.mxu0 0.0
  %430 = vmatpush.msra.mxu0 %v40
  %431 = vmatpush.msra.mxu0 %v39
  %432 = vmatpush.msra.mxu0 %v38
  %433 = vmatpush.msra.mxu0 %v37
  %434 = vmatmul.f32.gmra.mxu0 %v333
  %v435 = vpop.f32.mrf.mxu0
  %v436 = vadd.f32 0.0, %v435
  %437 = vdwg.mxu0
  %v438 = vadd.f32 %v107, %v436
  %v439 = vxor.u32 %v438, 2147483648
  %v440 = vmul.f32 %v439, 1.442695
  %v441 = vpow.pop %v440
  %v442 = vadd.f32 %v441, 1.0
  %v443 = vrcp.pop %v442
  %v444 = vmul.f32 %v442, %v443
  %v445 = vsub.f32 1.0, %v444
  %v446 = vmul.f32 %v443, %v445
  %v447 = vadd.f32 %v443, %v446
  %vm448 = vweird.f32 %v442
  %vm449 = vweird.f32 %v443
  %vm450 = vmor %vm448, %vm449
  %v451 = vsel %vm450, %v443, %v447
  %v452 = vand.u32 2147483647, %v442
  %vm453 = vcmp.eq.f32.partialorder %v452, 8.507059e+37
  %v454 = vand.u32 %v442, 2147483648
  %v455 = vor.u32 1.1754944e-38, %v454
  %v456 = vsel %vm453, %v455, %v451
  %v457 = vmul.f32 1.0, %v456
  %v458 = vtanh.pop %v438
  %v459 = vmul.f32 %v457, %v323
  %461 = vrot.lane.b32.xlu0 %v458, 64
  %v462 = vpop.permute.xlu0 %461
  %v464 = vmul.f32 %v457, %v462
  %466 = vrot.lane.b32.xlu0 %v464, 32
  %v467 = vpop.permute.xlu0 %466
  %v469 = vadd.f32 %v459, %v467
  %v470 = vtanh.pop %v469
  %472 = vrot.lane.b32.xlu0 %v470, 64
  %v473 = vpop.permute.xlu0 %472
  %v475 = vmul.f32 %v457, %v473
  %477 = vrot.lane.b32.xlu0 %v475, 32
  %v478 = vpop.permute.xlu0 %477
  %v479 = vsel %vm124, %v478, 0
  %481 = vmatpush.msra.mxu0 0.0
  %482 = vmatpush.msra.mxu0 0.0
  %483 = vmatpush.msra.mxu0 0.0
  %484 = vmatpush.msra.mxu0 0.0
  %485 = vmatpush.msra.mxu0 0.0
  %486 = vmatpush.msra.mxu0 0.0
  %487 = vmatpush.msra.mxu0 0.0
  %488 = vmatpush.msra.mxu0 0.0
  %489 = vmatpush.msra.mxu0 0.0
  %490 = vmatpush.msra.mxu0 0.0
  %491 = vmatpush.msra.mxu0 0.0
  %492 = vmatpush.msra.mxu0 0.0
  %493 = vmatpush.msra.mxu0 %v36
  %494 = vmatpush.msra.mxu0 %v35
  %495 = vmatpush.msra.mxu0 %v34
  %496 = vmatpush.msra.mxu0 %v33
  %497 = vmatmul.f32.gmra.mxu0 %v479
  %v498 = vpop.f32.mrf.mxu0
  %v499 = vadd.f32 %v187, %v498
  %500 = vdwg.mxu0
  %502 = vrot.lane.b32.xlu0 %v417, 32
  %v503 = vpop.permute.xlu0 %502
  %v504 = vsel %vm124, %v503, 0
  %506 = vmatpush.msra.mxu0 0.0
  %507 = vmatpush.msra.mxu0 0.0
  %508 = vmatpush.msra.mxu0 0.0
  %509 = vmatpush.msra.mxu0 0.0
  %510 = vmatpush.msra.mxu0 0.0
  %511 = vmatpush.msra.mxu0 0.0
  %512 = vmatpush.msra.mxu0 0.0
  %513 = vmatpush.msra.mxu0 0.0
  %514 = vmatpush.msra.mxu0 0.0
  %515 = vmatpush.msra.mxu0 0.0
  %516 = vmatpush.msra.mxu0 0.0
  %517 = vmatpush.msra.mxu0 0.0
  %518 = vmatpush.msra.mxu0 %v44
  %519 = vmatpush.msra.mxu0 %v43
  %520 = vmatpush.msra.mxu0 %v42
  %521 = vmatpush.msra.mxu0 %v41
  %522 = vmatmul.f32.gmra.mxu0 %v504
  %v523 = vpop.f32.mrf.mxu0
  %v524 = vadd.f32 0.0, %v523
  %525 = vdwg.mxu0
  %v526 = vadd.f32 %v499, %v524
  %v527 = vxor.u32 %v526, 2147483648
  %v528 = vmul.f32 %v527, 1.442695
  %v529 = vpow.pop %v528
  %v530 = vadd.f32 %v529, 1.0
  %v531 = vrcp.pop %v530
  %v532 = vmul.f32 %v530, %v531
  %v533 = vsub.f32 1.0, %v532
  %v534 = vmul.f32 %v531, %v533
  %v535 = vadd.f32 %v531, %v534
  %vm536 = vweird.f32 %v530
  %vm537 = vweird.f32 %v531
  %vm538 = vmor %vm536, %vm537
  %v539 = vsel %vm538, %v531, %v535
  %v540 = vand.u32 2147483647, %v530
  %vm541 = vcmp.eq.f32.partialorder %v540, 8.507059e+37
  %v542 = vand.u32 %v530, 2147483648
  %v543 = vor.u32 1.1754944e-38, %v542
  %v544 = vsel %vm541, %v543, %v539
  %v545 = vmul.f32 1.0, %v544
  %v546 = vtanh.pop %v526
  %v547 = vmul.f32 %v545, %v411
  %549 = vrot.lane.b32.xlu0 %v546, 64
  %v550 = vpop.permute.xlu0 %549
  %v552 = vmul.f32 %v545, %v550
  %554 = vrot.lane.b32.xlu0 %v552, 32
  %v555 = vpop.permute.xlu0 %554
  %v557 = vadd.f32 %v547, %v555
  %v558 = vtanh.pop %v557
  %560 = vrot.lane.b32.xlu0 %v558, 64
  %v561 = vpop.permute.xlu0 %560
  %v563 = vmul.f32 %v545, %v561
  %564 = vmatpush.msra.mxu0 0.0
  %565 = vmatpush.msra.mxu0 0.0
  %566 = vmatpush.msra.mxu0 0.0
  %567 = vmatpush.msra.mxu0 0.0
  %568 = vmatpush.msra.mxu0 0.0
  %569 = vmatpush.msra.mxu0 0.0
  %570 = vmatpush.msra.mxu0 0.0
  %571 = vmatpush.msra.mxu0 0.0
  %572 = vmatpush.msra.mxu0 0.0
  %573 = vmatpush.msra.mxu0 0.0
  %574 = vmatpush.msra.mxu0 0.0
  %575 = vmatpush.msra.mxu0 0.0
  %576 = vmatpush.msra.mxu0 %v40
  %577 = vmatpush.msra.mxu0 %v39
  %578 = vmatpush.msra.mxu0 %v38
  %579 = vmatpush.msra.mxu0 %v37
  %580 = vmatmul.f32.gmra.mxu0 %v479
  %v581 = vpop.f32.mrf.mxu0
  %v582 = vadd.f32 0.0, %v581
  %583 = vdwg.mxu0
  %v584 = vadd.f32 %v110, %v582
  %v585 = vxor.u32 %v584, 2147483648
  %v586 = vmul.f32 %v585, 1.442695
  %v587 = vpow.pop %v586
  %v588 = vadd.f32 %v587, 1.0
  %v589 = vrcp.pop %v588
  %v590 = vmul.f32 %v588, %v589
  %v591 = vsub.f32 1.0, %v590
  %v592 = vmul.f32 %v589, %v591
  %v593 = vadd.f32 %v589, %v592
  %vm594 = vweird.f32 %v588
  %vm595 = vweird.f32 %v589
  %vm596 = vmor %vm594, %vm595
  %v597 = vsel %vm596, %v589, %v593
  %v598 = vand.u32 2147483647, %v588
  %vm599 = vcmp.eq.f32.partialorder %v598, 8.507059e+37
  %v600 = vand.u32 %v588, 2147483648
  %v601 = vor.u32 1.1754944e-38, %v600
  %v602 = vsel %vm599, %v601, %v597
  %v603 = vmul.f32 1.0, %v602
  %v604 = vtanh.pop %v584
  %v605 = vmul.f32 %v603, %v469
  %607 = vrot.lane.b32.xlu0 %v604, 64
  %v608 = vpop.permute.xlu0 %607
  %v610 = vmul.f32 %v603, %v608
  %612 = vrot.lane.b32.xlu0 %v610, 32
  %v613 = vpop.permute.xlu0 %612
  %v615 = vadd.f32 %v605, %v613
  %v616 = vtanh.pop %v615
  %618 = vrot.lane.b32.xlu0 %v616, 64
  %v619 = vpop.permute.xlu0 %618
  %v621 = vmul.f32 %v603, %v619
  %623 = vrot.lane.b32.xlu0 %v621, 32
  %v624 = vpop.permute.xlu0 %623
  %v625 = vsel %vm124, %v624, 0
  %627 = vmatpush.msra.mxu0 0.0
  %628 = vmatpush.msra.mxu0 0.0
  %629 = vmatpush.msra.mxu0 0.0
  %630 = vmatpush.msra.mxu0 0.0
  %631 = vmatpush.msra.mxu0 0.0
  %632 = vmatpush.msra.mxu0 0.0
  %633 = vmatpush.msra.mxu0 0.0
  %634 = vmatpush.msra.mxu0 0.0
  %635 = vmatpush.msra.mxu0 0.0
  %636 = vmatpush.msra.mxu0 0.0
  %637 = vmatpush.msra.mxu0 0.0
  %638 = vmatpush.msra.mxu0 0.0
  %639 = vmatpush.msra.mxu0 %v36
  %640 = vmatpush.msra.mxu0 %v35
  %641 = vmatpush.msra.mxu0 %v34
  %642 = vmatpush.msra.mxu0 %v33
  %643 = vmatmul.f32.gmra.mxu0 %v625
  %v644 = vpop.f32.mrf.mxu0
  %v645 = vadd.f32 %v187, %v644
  %646 = vdwg.mxu0
  %648 = vrot.lane.b32.xlu0 %v563, 32
  %v649 = vpop.permute.xlu0 %648
  %v650 = vsel %vm124, %v649, 0
  %652 = vmatpush.msra.mxu0 0.0
  %653 = vmatpush.msra.mxu0 0.0
  %654 = vmatpush.msra.mxu0 0.0
  %655 = vmatpush.msra.mxu0 0.0
  %656 = vmatpush.msra.mxu0 0.0
  %657 = vmatpush.msra.mxu0 0.0
  %658 = vmatpush.msra.mxu0 0.0
  %659 = vmatpush.msra.mxu0 0.0
  %660 = vmatpush.msra.mxu0 0.0
  %661 = vmatpush.msra.mxu0 0.0
  %662 = vmatpush.msra.mxu0 0.0
  %663 = vmatpush.msra.mxu0 0.0
  %664 = vmatpush.msra.mxu0 %v44
  %665 = vmatpush.msra.mxu0 %v43
  %666 = vmatpush.msra.mxu0 %v42
  %667 = vmatpush.msra.mxu0 %v41
  %668 = vmatmul.f32.gmra.mxu0 %v650
  %v669 = vpop.f32.mrf.mxu0
  %v670 = vadd.f32 0.0, %v669
  %671 = vdwg.mxu0
  %v672 = vadd.f32 %v645, %v670
  %v673 = vxor.u32 %v672, 2147483648
  %v674 = vmul.f32 %v673, 1.442695
  %v675 = vpow.pop %v674
  %v676 = vadd.f32 %v675, 1.0
  %v677 = vrcp.pop %v676
  %v678 = vmul.f32 %v676, %v677
  %v679 = vsub.f32 1.0, %v678
  %v680 = vmul.f32 %v677, %v679
  %v681 = vadd.f32 %v677, %v680
  %vm682 = vweird.f32 %v676
  %vm683 = vweird.f32 %v677
  %vm684 = vmor %vm682, %vm683
  %v685 = vsel %vm684, %v677, %v681
  %v686 = vand.u32 2147483647, %v676
  %vm687 = vcmp.eq.f32.partialorder %v686, 8.507059e+37
  %v688 = vand.u32 %v676, 2147483648
  %v689 = vor.u32 1.1754944e-38, %v688
  %v690 = vsel %vm687, %v689, %v685
  %v691 = vmul.f32 1.0, %v690
  %v692 = vtanh.pop %v672
  %v693 = vmul.f32 %v691, %v557
  %695 = vrot.lane.b32.xlu0 %v692, 64
  %v696 = vpop.permute.xlu0 %695
  %v698 = vmul.f32 %v691, %v696
  %700 = vrot.lane.b32.xlu0 %v698, 32
  %v701 = vpop.permute.xlu0 %700
  %v703 = vadd.f32 %v693, %v701
  %v704 = vtanh.pop %v703
  %706 = vrot.lane.b32.xlu0 %v704, 64
  %v707 = vpop.permute.xlu0 %706
  %v709 = vmul.f32 %v691, %v707
  %710 = vmatpush.msra.mxu0 0.0
  %711 = vmatpush.msra.mxu0 0.0
  %712 = vmatpush.msra.mxu0 0.0
  %713 = vmatpush.msra.mxu0 0.0
  %714 = vmatpush.msra.mxu0 0.0
  %715 = vmatpush.msra.mxu0 0.0
  %716 = vmatpush.msra.mxu0 0.0
  %717 = vmatpush.msra.mxu0 0.0
  %718 = vmatpush.msra.mxu0 0.0
  %719 = vmatpush.msra.mxu0 0.0
  %720 = vmatpush.msra.mxu0 0.0
  %721 = vmatpush.msra.mxu0 0.0
  %722 = vmatpush.msra.mxu0 %v40
  %723 = vmatpush.msra.mxu0 %v39
  %724 = vmatpush.msra.mxu0 %v38
  %725 = vmatpush.msra.mxu0 %v37
  %726 = vmatmul.f32.gmra.mxu0 %v625
  %v727 = vpop.f32.mrf.mxu0
  %v728 = vadd.f32 0.0, %v727
  %729 = vdwg.mxu0
  %v730 = vadd.f32 %v113, %v728
  %v731 = vxor.u32 %v730, 2147483648
  %v732 = vmul.f32 %v731, 1.442695
  %v733 = vpow.pop %v732
  %v734 = vadd.f32 %v733, 1.0
  %v735 = vrcp.pop %v734
  %v736 = vmul.f32 %v734, %v735
  %v737 = vsub.f32 1.0, %v736
  %v738 = vmul.f32 %v735, %v737
  %v739 = vadd.f32 %v735, %v738
  %vm740 = vweird.f32 %v734
  %vm741 = vweird.f32 %v735
  %vm742 = vmor %vm740, %vm741
  %v743 = vsel %vm742, %v735, %v739
  %v744 = vand.u32 2147483647, %v734
  %vm745 = vcmp.eq.f32.partialorder %v744, 8.507059e+37
  %v746 = vand.u32 %v734, 2147483648
  %v747 = vor.u32 1.1754944e-38, %v746
  %v748 = vsel %vm745, %v747, %v743
  %v749 = vmul.f32 1.0, %v748
  %v750 = vtanh.pop %v730
  %v751 = vmul.f32 %v749, %v615
  %753 = vrot.lane.b32.xlu0 %v750, 64
  %v754 = vpop.permute.xlu0 %753
  %v756 = vmul.f32 %v749, %v754
  %758 = vrot.lane.b32.xlu0 %v756, 32
  %v759 = vpop.permute.xlu0 %758
  %v761 = vadd.f32 %v751, %v759
  %v762 = vtanh.pop %v761
  %764 = vrot.lane.b32.xlu0 %v762, 64
  %v765 = vpop.permute.xlu0 %764
  %v767 = vmul.f32 %v749, %v765
  %769 = vrot.lane.b32.xlu0 %v767, 32
  %v770 = vpop.permute.xlu0 %769
  %v771 = vsel %vm124, %v770, 0
  %773 = vmatpush.msra.mxu0 0.0
  %774 = vmatpush.msra.mxu0 0.0
  %775 = vmatpush.msra.mxu0 0.0
  %776 = vmatpush.msra.mxu0 0.0
  %777 = vmatpush.msra.mxu0 0.0
  %778 = vmatpush.msra.mxu0 0.0
  %779 = vmatpush.msra.mxu0 0.0
  %780 = vmatpush.msra.mxu0 0.0
  %781 = vmatpush.msra.mxu0 0.0
  %782 = vmatpush.msra.mxu0 0.0
  %783 = vmatpush.msra.mxu0 0.0
  %784 = vmatpush.msra.mxu0 0.0
  %785 = vmatpush.msra.mxu0 %v36
  %786 = vmatpush.msra.mxu0 %v35
  %787 = vmatpush.msra.mxu0 %v34
  %788 = vmatpush.msra.mxu0 %v33
  %789 = vmatmul.f32.gmra.mxu0 %v771
  %v790 = vpop.f32.mrf.mxu0
  %v791 = vadd.f32 %v187, %v790
  %792 = vdwg.mxu0
  %794 = vrot.lane.b32.xlu0 %v709, 32
  %v795 = vpop.permute.xlu0 %794
  %v796 = vsel %vm124, %v795, 0
  %798 = vmatpush.msra.mxu0 0.0
  %799 = vmatpush.msra.mxu0 0.0
  %800 = vmatpush.msra.mxu0 0.0
  %801 = vmatpush.msra.mxu0 0.0
  %802 = vmatpush.msra.mxu0 0.0
  %803 = vmatpush.msra.mxu0 0.0
  %804 = vmatpush.msra.mxu0 0.0
  %805 = vmatpush.msra.mxu0 0.0
  %806 = vmatpush.msra.mxu0 0.0
  %807 = vmatpush.msra.mxu0 0.0
  %808 = vmatpush.msra.mxu0 0.0
  %809 = vmatpush.msra.mxu0 0.0
  %810 = vmatpush.msra.mxu0 %v44
  %811 = vmatpush.msra.mxu0 %v43
  %812 = vmatpush.msra.mxu0 %v42
  %813 = vmatpush.msra.mxu0 %v41
  %814 = vmatmul.f32.gmra.mxu0 %v796
  %v815 = vpop.f32.mrf.mxu0
  %v816 = vadd.f32 0.0, %v815
  %817 = vdwg.mxu0
  %v818 = vadd.f32 %v791, %v816
  %v819 = vxor.u32 %v818, 2147483648
  %v820 = vmul.f32 %v819, 1.442695
  %v821 = vpow.pop %v820
  %v822 = vadd.f32 %v821, 1.0
  %v823 = vrcp.pop %v822
  %v824 = vmul.f32 %v822, %v823
  %v825 = vsub.f32 1.0, %v824
  %v826 = vmul.f32 %v823, %v825
  %v827 = vadd.f32 %v823, %v826
  %vm828 = vweird.f32 %v822
  %vm829 = vweird.f32 %v823
  %vm830 = vmor %vm828, %vm829
  %v831 = vsel %vm830, %v823, %v827
  %v832 = vand.u32 2147483647, %v822
  %vm833 = vcmp.eq.f32.partialorder %v832, 8.507059e+37
  %v834 = vand.u32 %v822, 2147483648
  %v835 = vor.u32 1.1754944e-38, %v834
  %v836 = vsel %vm833, %v835, %v831
  %v837 = vmul.f32 1.0, %v836
  %v838 = vtanh.pop %v818
  %v839 = vmul.f32 %v837, %v703
  %841 = vrot.lane.b32.xlu0 %v838, 64
  %v842 = vpop.permute.xlu0 %841
  %v844 = vmul.f32 %v837, %v842
  %846 = vrot.lane.b32.xlu0 %v844, 32
  %v847 = vpop.permute.xlu0 %846
  %v849 = vadd.f32 %v839, %v847
  %v850 = vtanh.pop %v849
  %852 = vrot.lane.b32.xlu0 %v850, 64
  %v853 = vpop.permute.xlu0 %852
  %v855 = vmul.f32 %v837, %v853
  %856 = vmatpush.msra.mxu0 0.0
  %857 = vmatpush.msra.mxu0 0.0
  %858 = vmatpush.msra.mxu0 0.0
  %859 = vmatpush.msra.mxu0 0.0
  %860 = vmatpush.msra.mxu0 0.0
  %861 = vmatpush.msra.mxu0 0.0
  %862 = vmatpush.msra.mxu0 0.0
  %863 = vmatpush.msra.mxu0 0.0
  %864 = vmatpush.msra.mxu0 0.0
  %865 = vmatpush.msra.mxu0 0.0
  %866 = vmatpush.msra.mxu0 0.0
  %867 = vmatpush.msra.mxu0 0.0
  %868 = vmatpush.msra.mxu0 %v40
  %869 = vmatpush.msra.mxu0 %v39
  %870 = vmatpush.msra.mxu0 %v38
  %871 = vmatpush.msra.mxu0 %v37
  %872 = vmatmul.f32.gmra.mxu0 %v771
  %v873 = vpop.f32.mrf.mxu0
  %v874 = vadd.f32 0.0, %v873
  %875 = vdwg.mxu0
  %v876 = vadd.f32 %v116, %v874
  %v877 = vxor.u32 %v876, 2147483648
  %v878 = vmul.f32 %v877, 1.442695
  %v879 = vpow.pop %v878
  %v880 = vadd.f32 %v879, 1.0
  %v881 = vrcp.pop %v880
  %v882 = vmul.f32 %v880, %v881
  %v883 = vsub.f32 1.0, %v882
  %v884 = vmul.f32 %v881, %v883
  %v885 = vadd.f32 %v881, %v884
  %vm886 = vweird.f32 %v880
  %vm887 = vweird.f32 %v881
  %vm888 = vmor %vm886, %vm887
  %v889 = vsel %vm888, %v881, %v885
  %v890 = vand.u32 2147483647, %v880
  %vm891 = vcmp.eq.f32.partialorder %v890, 8.507059e+37
  %v892 = vand.u32 %v880, 2147483648
  %v893 = vor.u32 1.1754944e-38, %v892
  %v894 = vsel %vm891, %v893, %v889
  %v895 = vmul.f32 1.0, %v894
  %v896 = vtanh.pop %v876
  %v897 = vmul.f32 %v895, %v761
  %899 = vrot.lane.b32.xlu0 %v896, 64
  %v900 = vpop.permute.xlu0 %899
  %v902 = vmul.f32 %v895, %v900
  %904 = vrot.lane.b32.xlu0 %v902, 32
  %v905 = vpop.permute.xlu0 %904
  %v907 = vadd.f32 %v897, %v905
  %v908 = vtanh.pop %v907
  %910 = vrot.lane.b32.xlu0 %v908, 64
  %v911 = vpop.permute.xlu0 %910
  %v913 = vmul.f32 %v895, %v911
  %915 = vrot.lane.b32.xlu0 %v913, 32
  %v916 = vpop.permute.xlu0 %915
  %v917 = vsel %vm124, %v916, 0
  %919 = vmatpush.msra.mxu0 0.0
  %920 = vmatpush.msra.mxu0 0.0
  %921 = vmatpush.msra.mxu0 0.0
  %922 = vmatpush.msra.mxu0 0.0
  %923 = vmatpush.msra.mxu0 0.0
  %924 = vmatpush.msra.mxu0 0.0
  %925 = vmatpush.msra.mxu0 0.0
  %926 = vmatpush.msra.mxu0 0.0
  %927 = vmatpush.msra.mxu0 0.0
  %928 = vmatpush.msra.mxu0 0.0
  %929 = vmatpush.msra.mxu0 0.0
  %930 = vmatpush.msra.mxu0 0.0
  %931 = vmatpush.msra.mxu0 %v36
  %932 = vmatpush.msra.mxu0 %v35
  %933 = vmatpush.msra.mxu0 %v34
  %934 = vmatpush.msra.mxu0 %v33
  %935 = vmatmul.f32.gmra.mxu0 %v917
  %v936 = vpop.f32.mrf.mxu0
  %v937 = vadd.f32 %v187, %v936
  %938 = vdwg.mxu0
  %940 = vrot.lane.b32.xlu0 %v855, 32
  %v941 = vpop.permute.xlu0 %940
  %v942 = vsel %vm124, %v941, 0
  %944 = vmatpush.msra.mxu0 0.0
  %945 = vmatpush.msra.mxu0 0.0
  %946 = vmatpush.msra.mxu0 0.0
  %947 = vmatpush.msra.mxu0 0.0
  %948 = vmatpush.msra.mxu0 0.0
  %949 = vmatpush.msra.mxu0 0.0
  %950 = vmatpush.msra.mxu0 0.0
  %951 = vmatpush.msra.mxu0 0.0
  %952 = vmatpush.msra.mxu0 0.0
  %953 = vmatpush.msra.mxu0 0.0
  %954 = vmatpush.msra.mxu0 0.0
  %955 = vmatpush.msra.mxu0 0.0
  %956 = vmatpush.msra.mxu0 %v44
  %957 = vmatpush.msra.mxu0 %v43
  %958 = vmatpush.msra.mxu0 %v42
  %959 = vmatpush.msra.mxu0 %v41
  %960 = vmatmul.f32.gmra.mxu0 %v942
  %v961 = vpop.f32.mrf.mxu0
  %v962 = vadd.f32 0.0, %v961
  %963 = vdwg.mxu0
  %v964 = vadd.f32 %v937, %v962
  %v965 = vxor.u32 %v964, 2147483648
  %v966 = vmul.f32 %v965, 1.442695
  %v967 = vpow.pop %v966
  %v968 = vadd.f32 %v967, 1.0
  %v969 = vrcp.pop %v968
  %v970 = vmul.f32 %v968, %v969
  %v971 = vsub.f32 1.0, %v970
  %v972 = vmul.f32 %v969, %v971
  %v973 = vadd.f32 %v969, %v972
  %vm974 = vweird.f32 %v968
  %vm975 = vweird.f32 %v969
  %vm976 = vmor %vm974, %vm975
  %v977 = vsel %vm976, %v969, %v973
  %v978 = vand.u32 2147483647, %v968
  %vm979 = vcmp.eq.f32.partialorder %v978, 8.507059e+37
  %v980 = vand.u32 %v968, 2147483648
  %v981 = vor.u32 1.1754944e-38, %v980
  %v982 = vsel %vm979, %v981, %v977
  %v983 = vmul.f32 1.0, %v982
  %v984 = vtanh.pop %v964
  %v985 = vmul.f32 %v983, %v849
  %987 = vrot.lane.b32.xlu0 %v984, 64
  %v988 = vpop.permute.xlu0 %987
  %v990 = vmul.f32 %v983, %v988
  %992 = vrot.lane.b32.xlu0 %v990, 32
  %v993 = vpop.permute.xlu0 %992
  %v995 = vadd.f32 %v985, %v993
  %v996 = vtanh.pop %v995
  %998 = vrot.lane.b32.xlu0 %v996, 64
  %v999 = vpop.permute.xlu0 %998
  %v1001 = vmul.f32 %v983, %v999
  %1002 = vmatpush.msra.mxu0 0.0
  %1003 = vmatpush.msra.mxu0 0.0
  %1004 = vmatpush.msra.mxu0 0.0
  %1005 = vmatpush.msra.mxu0 0.0
  %1006 = vmatpush.msra.mxu0 0.0
  %1007 = vmatpush.msra.mxu0 0.0
  %1008 = vmatpush.msra.mxu0 0.0
  %1009 = vmatpush.msra.mxu0 0.0
  %1010 = vmatpush.msra.mxu0 0.0
  %1011 = vmatpush.msra.mxu0 0.0
  %1012 = vmatpush.msra.mxu0 0.0
  %1013 = vmatpush.msra.mxu0 0.0
  %1014 = vmatpush.msra.mxu0 %v40
  %1015 = vmatpush.msra.mxu0 %v39
  %1016 = vmatpush.msra.mxu0 %v38
  %1017 = vmatpush.msra.mxu0 %v37
  %1018 = vmatmul.f32.gmra.mxu0 %v917
  %v1019 = vpop.f32.mrf.mxu0
  %v1020 = vadd.f32 0.0, %v1019
  %1021 = vdwg.mxu0
  %v1022 = vadd.f32 %v119, %v1020
  %v1023 = vxor.u32 %v1022, 2147483648
  %v1024 = vmul.f32 %v1023, 1.442695
  %v1025 = vpow.pop %v1024
  %v1026 = vadd.f32 %v1025, 1.0
  %v1027 = vrcp.pop %v1026
  %v1028 = vmul.f32 %v1026, %v1027
  %v1029 = vsub.f32 1.0, %v1028
  %v1030 = vmul.f32 %v1027, %v1029
  %v1031 = vadd.f32 %v1027, %v1030
  %vm1032 = vweird.f32 %v1026
  %vm1033 = vweird.f32 %v1027
  %vm1034 = vmor %vm1032, %vm1033
  %v1035 = vsel %vm1034, %v1027, %v1031
  %v1036 = vand.u32 2147483647, %v1026
  %vm1037 = vcmp.eq.f32.partialorder %v1036, 8.507059e+37
  %v1038 = vand.u32 %v1026, 2147483648
  %v1039 = vor.u32 1.1754944e-38, %v1038
  %v1040 = vsel %vm1037, %v1039, %v1035
  %v1041 = vmul.f32 1.0, %v1040
  %v1042 = vtanh.pop %v1022
  %v1043 = vmul.f32 %v1041, %v907
  %1045 = vrot.lane.b32.xlu0 %v1042, 64
  %v1046 = vpop.permute.xlu0 %1045
  %v1048 = vmul.f32 %v1041, %v1046
  %1050 = vrot.lane.b32.xlu0 %v1048, 32
  %v1051 = vpop.permute.xlu0 %1050
  %v1053 = vadd.f32 %v1043, %v1051
  %v1054 = vtanh.pop %v1053
  %1056 = vrot.lane.b32.xlu0 %v1054, 64
  %v1057 = vpop.permute.xlu0 %1056
  %v1059 = vmul.f32 %v1041, %v1057
  %1061 = vrot.lane.b32.xlu0 %v1059, 32
  %v1062 = vpop.permute.xlu0 %1061
  %v1063 = vsel %vm124, %v1062, 0
  %1065 = vmatpush.msra.mxu0 0.0
  %1066 = vmatpush.msra.mxu0 0.0
  %1067 = vmatpush.msra.mxu0 0.0
  %1068 = vmatpush.msra.mxu0 0.0
  %1069 = vmatpush.msra.mxu0 0.0
  %1070 = vmatpush.msra.mxu0 0.0
  %1071 = vmatpush.msra.mxu0 0.0
  %1072 = vmatpush.msra.mxu0 0.0
  %1073 = vmatpush.msra.mxu0 0.0
  %1074 = vmatpush.msra.mxu0 0.0
  %1075 = vmatpush.msra.mxu0 0.0
  %1076 = vmatpush.msra.mxu0 0.0
  %1077 = vmatpush.msra.mxu0 %v36
  %1078 = vmatpush.msra.mxu0 %v35
  %1079 = vmatpush.msra.mxu0 %v34
  %1080 = vmatpush.msra.mxu0 %v33
  %1081 = vmatmul.f32.gmra.mxu0 %v1063
  %v1082 = vpop.f32.mrf.mxu0
  %v1083 = vadd.f32 %v187, %v1082
  %1084 = vdwg.mxu0
  %1086 = vrot.lane.b32.xlu0 %v1001, 32
  %v1087 = vpop.permute.xlu0 %1086
  %v1088 = vsel %vm124, %v1087, 0
  %1090 = vmatpush.msra.mxu0 0.0
  %1091 = vmatpush.msra.mxu0 0.0
  %1092 = vmatpush.msra.mxu0 0.0
  %1093 = vmatpush.msra.mxu0 0.0
  %1094 = vmatpush.msra.mxu0 0.0
  %1095 = vmatpush.msra.mxu0 0.0
  %1096 = vmatpush.msra.mxu0 0.0
  %1097 = vmatpush.msra.mxu0 0.0
  %1098 = vmatpush.msra.mxu0 0.0
  %1099 = vmatpush.msra.mxu0 0.0
  %1100 = vmatpush.msra.mxu0 0.0
  %1101 = vmatpush.msra.mxu0 0.0
  %1102 = vmatpush.msra.mxu0 %v44
  %1103 = vmatpush.msra.mxu0 %v43
  %1104 = vmatpush.msra.mxu0 %v42
  %1105 = vmatpush.msra.mxu0 %v41
  %1106 = vmatmul.f32.gmra.mxu0 %v1088
  %v1107 = vpop.f32.mrf.mxu0
  %v1108 = vadd.f32 0.0, %v1107
  %1109 = vdwg.mxu0
  %v1110 = vadd.f32 %v1083, %v1108
  %v1111 = vxor.u32 %v1110, 2147483648
  %v1112 = vmul.f32 %v1111, 1.442695
  %v1113 = vpow.pop %v1112
  %v1114 = vadd.f32 %v1113, 1.0
  %v1115 = vrcp.pop %v1114
  %v1116 = vmul.f32 %v1114, %v1115
  %v1117 = vsub.f32 1.0, %v1116
  %v1118 = vmul.f32 %v1115, %v1117
  %v1119 = vadd.f32 %v1115, %v1118
  %vm1120 = vweird.f32 %v1114
  %vm1121 = vweird.f32 %v1115
  %vm1122 = vmor %vm1120, %vm1121
  %v1123 = vsel %vm1122, %v1115, %v1119
  %v1124 = vand.u32 2147483647, %v1114
  %vm1125 = vcmp.eq.f32.partialorder %v1124, 8.507059e+37
  %v1126 = vand.u32 %v1114, 2147483648
  %v1127 = vor.u32 1.1754944e-38, %v1126
  %v1128 = vsel %vm1125, %v1127, %v1123
  %v1129 = vmul.f32 1.0, %v1128
  %v1130 = vtanh.pop %v1110
  %v1131 = vmul.f32 %v1129, %v995
  %1133 = vrot.lane.b32.xlu0 %v1130, 64
  %v1134 = vpop.permute.xlu0 %1133
  %v1136 = vmul.f32 %v1129, %v1134
  %1138 = vrot.lane.b32.xlu0 %v1136, 32
  %v1139 = vpop.permute.xlu0 %1138
  %v1141 = vadd.f32 %v1131, %v1139
  %v1142 = vtanh.pop %v1141
  %1144 = vrot.lane.b32.xlu0 %v1142, 64
  %v1145 = vpop.permute.xlu0 %1144
  %v1147 = vmul.f32 %v1129, %v1145
  %1148 = vmatpush.msra.mxu0 0.0
  %1149 = vmatpush.msra.mxu0 0.0
  %1150 = vmatpush.msra.mxu0 0.0
  %1151 = vmatpush.msra.mxu0 0.0
  %1152 = vmatpush.msra.mxu0 0.0
  %1153 = vmatpush.msra.mxu0 0.0
  %1154 = vmatpush.msra.mxu0 0.0
  %1155 = vmatpush.msra.mxu0 0.0
  %1156 = vmatpush.msra.mxu0 0.0
  %1157 = vmatpush.msra.mxu0 0.0
  %1158 = vmatpush.msra.mxu0 0.0
  %1159 = vmatpush.msra.mxu0 0.0
  %1160 = vmatpush.msra.mxu0 %v40
  %1161 = vmatpush.msra.mxu0 %v39
  %1162 = vmatpush.msra.mxu0 %v38
  %1163 = vmatpush.msra.mxu0 %v37
  %1164 = vmatmul.f32.gmra.mxu0 %v1063
  %v1165 = vpop.f32.mrf.mxu0
  %v1166 = vadd.f32 0.0, %v1165
  %1167 = vdwg.mxu0
  %v1168 = vadd.f32 %v122, %v1166
  %v1169 = vxor.u32 %v1168, 2147483648
  %v1170 = vmul.f32 %v1169, 1.442695
  %v1171 = vpow.pop %v1170
  %v1172 = vadd.f32 %v1171, 1.0
  %v1173 = vrcp.pop %v1172
  %v1174 = vmul.f32 %v1172, %v1173
  %v1175 = vsub.f32 1.0, %v1174
  %v1176 = vmul.f32 %v1173, %v1175
  %v1177 = vadd.f32 %v1173, %v1176
  %vm1178 = vweird.f32 %v1172
  %vm1179 = vweird.f32 %v1173
  %vm1180 = vmor %vm1178, %vm1179
  %v1181 = vsel %vm1180, %v1173, %v1177
  %v1182 = vand.u32 2147483647, %v1172
  %vm1183 = vcmp.eq.f32.partialorder %v1182, 8.507059e+37
  %v1184 = vand.u32 %v1172, 2147483648
  %v1185 = vor.u32 1.1754944e-38, %v1184
  %v1186 = vsel %vm1183, %v1185, %v1181
  %v1187 = vmul.f32 1.0, %v1186
  %v1188 = vtanh.pop %v1168
  %v1189 = vmul.f32 %v1187, %v1053
  %1191 = vrot.lane.b32.xlu0 %v1188, 64
  %v1192 = vpop.permute.xlu0 %1191
  %v1194 = vmul.f32 %v1187, %v1192
  %1196 = vrot.lane.b32.xlu0 %v1194, 32
  %v1197 = vpop.permute.xlu0 %1196
  %v1199 = vadd.f32 %v1189, %v1197
  %v1200 = vtanh.pop %v1199
  %1202 = vrot.lane.b32.xlu0 %v1200, 64
  %v1203 = vpop.permute.xlu0 %1202
  %v1205 = vmul.f32 %v1187, %v1203
  %1207 = vrot.lane.b32.xlu0 %v1205, 32
  %v1208 = vpop.permute.xlu0 %1207
  %v1209 = vsel %vm124, %v1208, 0
  %1211 = vmatpush.msra.mxu0 0.0
  %1212 = vmatpush.msra.mxu0 0.0
  %1213 = vmatpush.msra.mxu0 0.0
  %1214 = vmatpush.msra.mxu0 0.0
  %1215 = vmatpush.msra.mxu0 0.0
  %1216 = vmatpush.msra.mxu0 0.0
  %1217 = vmatpush.msra.mxu0 0.0
  %1218 = vmatpush.msra.mxu0 0.0
  %1219 = vmatpush.msra.mxu0 0.0
  %1220 = vmatpush.msra.mxu0 0.0
  %1221 = vmatpush.msra.mxu0 0.0
  %1222 = vmatpush.msra.mxu0 0.0
  %1223 = vmatpush.msra.mxu0 %v36
  %1224 = vmatpush.msra.mxu0 %v35
  %1225 = vmatpush.msra.mxu0 %v34
  %1226 = vmatpush.msra.mxu0 %v33
  %1227 = vmatmul.f32.gmra.mxu0 %v1209
  %v1228 = vpop.f32.mrf.mxu0
  %v1229 = vadd.f32 %v187, %v1228
  %1230 = vdwg.mxu0
  %1232 = vrot.lane.b32.xlu0 %v1147, 32
  %v1233 = vpop.permute.xlu0 %1232
  %v1234 = vsel %vm124, %v1233, 0
  %1236 = vmatpush.msra.mxu0 0.0
  %1237 = vmatpush.msra.mxu0 0.0
  %1238 = vmatpush.msra.mxu0 0.0
  %1239 = vmatpush.msra.mxu0 0.0
  %1240 = vmatpush.msra.mxu0 0.0
  %1241 = vmatpush.msra.mxu0 0.0
  %1242 = vmatpush.msra.mxu0 0.0
  %1243 = vmatpush.msra.mxu0 0.0
  %1244 = vmatpush.msra.mxu0 0.0
  %1245 = vmatpush.msra.mxu0 0.0
  %1246 = vmatpush.msra.mxu0 0.0
  %1247 = vmatpush.msra.mxu0 0.0
  %1248 = vmatpush.msra.mxu0 %v44
  %1249 = vmatpush.msra.mxu0 %v43
  %1250 = vmatpush.msra.mxu0 %v42
  %1251 = vmatpush.msra.mxu0 %v41
  %1252 = vmatmul.f32.gmra.mxu0 %v1234
  %v1253 = vpop.f32.mrf.mxu0
  %v1254 = vadd.f32 0.0, %v1253
  %1255 = vdwg.mxu0
  %v1256 = vadd.f32 %v1229, %v1254
  %v1257 = vxor.u32 %v1256, 2147483648
  %v1258 = vmul.f32 %v1257, 1.442695
  %v1259 = vpow.pop %v1258
  %v1260 = vadd.f32 %v1259, 1.0
  %v1261 = vrcp.pop %v1260
  %v1262 = vmul.f32 %v1260, %v1261
  %v1263 = vsub.f32 1.0, %v1262
  %v1264 = vmul.f32 %v1261, %v1263
  %v1265 = vadd.f32 %v1261, %v1264
  %vm1266 = vweird.f32 %v1260
  %vm1267 = vweird.f32 %v1261
  %vm1268 = vmor %vm1266, %vm1267
  %v1269 = vsel %vm1268, %v1261, %v1265
  %v1270 = vand.u32 2147483647, %v1260
  %vm1271 = vcmp.eq.f32.partialorder %v1270, 8.507059e+37
  %v1272 = vand.u32 %v1260, 2147483648
  %v1273 = vor.u32 1.1754944e-38, %v1272
  %v1274 = vsel %vm1271, %v1273, %v1269
  %v1275 = vmul.f32 1.0, %v1274
  %v1276 = vtanh.pop %v1256
  %v1277 = vmul.f32 %v1275, %v1141
  %1279 = vrot.lane.b32.xlu0 %v1276, 64
  %v1280 = vpop.permute.xlu0 %1279
  %v1282 = vmul.f32 %v1275, %v1280
  %1284 = vrot.lane.b32.xlu0 %v1282, 32
  %v1285 = vpop.permute.xlu0 %1284
  %v1287 = vadd.f32 %v1277, %v1285
  %v1288 = vtanh.pop %v1287
  %1290 = vrot.lane.b32.xlu0 %v1288, 64
  %v1291 = vpop.permute.xlu0 %1290
  %v1293 = vmul.f32 %v1275, %v1291
  %v1294 = vld [vmem:[%s7] sm:$0xff]
  %v1295 = vld [vmem:[%s7 + $0x8] sm:$0xff]
  %v1296 = vld [vmem:[%s7 + $0x10] sm:$0xff]
  %v1297 = vld [vmem:[%s7 + $0x18] sm:$0xff]
  %v1298 = vld [vmem:[%s8] sm:$0x1]
  %v1300 = vperm.slane %v1298, 0
  %1303 = vrot.lane.b32.xlu0 %v1293, 32
  %v1304 = vpop.permute.xlu0 %1303
  %v1305 = vsel %vm124, %v1304, 0
  %1307 = vmatpush.msra.mxu0 0.0
  %1308 = vmatpush.msra.mxu0 0.0
  %1309 = vmatpush.msra.mxu0 0.0
  %1310 = vmatpush.msra.mxu0 0.0
  %1311 = vmatpush.msra.mxu0 0.0
  %1312 = vmatpush.msra.mxu0 0.0
  %1313 = vmatpush.msra.mxu0 0.0
  %1314 = vmatpush.msra.mxu0 0.0
  %1315 = vmatpush.msra.mxu0 0.0
  %1316 = vmatpush.msra.mxu0 0.0
  %1317 = vmatpush.msra.mxu0 0.0
  %1318 = vmatpush.msra.mxu0 0.0
  %1319 = vmatpush.msra.mxu0 %v1297
  %1320 = vmatpush.msra.mxu0 %v1296
  %1321 = vmatpush.msra.mxu0 %v1295
  %1322 = vmatpush.msra.mxu0 %v1294
  %1323 = vmatmul.f32.gmra.mxu0 %v1305
  %v1324 = vpop.f32.mrf.mxu0
  %v1325 = vadd.f32 %v1300, %v1324
  %1326 = vdwg.mxu0
  %vm1327 = vcmask 31744
  %1328 = vst.msk [vmem:[%s9] sm:$0xff] %vm1327, %v1325
  // Predicated region
  $region38: #{vanilla_lstm_forward.1} parent=0 // pred_check
    _
  $region39: #{vanilla_lstm_forward.1} parent=0 // pred_check_branch
    %1330 = sbr.rel (0) target = $region41
  $region40: #{vanilla_lstm_forward.1} parent=0 // pred_region
    _
  $region41: #{vanilla_lstm_forward.1} parent=0 // pred_fallthru
    _
  // Predicated region
  $region42: #{vanilla_lstm_forward.1} parent=0 // pred_check
    _
  $region43: #{vanilla_lstm_forward.1} parent=0 // pred_check_branch
    %1332 = sbr.rel (0) target = $region45
  $region44: #{vanilla_lstm_forward.1} parent=0 // pred_region
    _
  $region45: #{vanilla_lstm_forward.1} parent=0 // pred_fallthru
    _

</llo_original>
